<compile_context>
chip_gen: v5e
topology: v5e:2x2
jax: 0.10.0
libtpu: 0.0.40
codegen_flags: <defaults>
</compile_context>

<pallas_src>
import jax
import jax.numpy as jnp
from jax.experimental import pallas as pl
from jax.experimental.pallas import tpu as pltpu

LANE = 128
CHUNK = 8                      # inner-loop tile = 8 sublanes x 128 lanes = 1 vreg
MAX_BLOCK_SUBLANES = 256       # per-grid-step block <= 256*128 = 32768 states


# ---- small algebra helpers on tuples of (CHUNK, LANE) tiles ------------------
def _add(a, b): return tuple(x + y for x, y in zip(a, b))
def _sub(a, b): return tuple(x - y for x, y in zip(a, b))
def _scale(s, a): return tuple(s * x for x in a)
def _dot(a, b): return a[0] * b[0] + a[1] * b[1] + a[2] * b[2]


def _cross(a, b):
    return (a[1] * b[2] - a[2] * b[1],
            a[2] * b[0] - a[0] * b[2],
            a[0] * b[1] - a[1] * b[0])


def _rnorm(a):                 # 1 / ||a|| via a single EUP rsqrt
    return jax.lax.rsqrt(_dot(a, a))


def _matvec(M, v):             # M @ v
    return tuple(_dot(row, v) for row in M)


def _matTvec(M, v):            # M.T @ v
    return tuple(M[0][j] * v[0] + M[1][j] * v[1] + M[2][j] * v[2] for j in range(3))


def _geometric_controller_kernel(st_ref, rf_ref, par_ref, out_ref):
    # st_ref:  (13, S, 128) state  [pos(3), quat xyzw(4), vel(3), ang_vel(3)], component-major
    # rf_ref:  (24, S, 128) ref    [pos, vel, acc, acc_dot, acc_ddot, b1, b1_dot, b1_ddot]
    # par_ref: (17,) SMEM = [-kp, -kv, 0.5*kori, -kw, m, m*g, -1/m, g, J row-major(9)]
    # out_ref: (4, S, 128) = [max(0, thrust), Mx, My, Mz]
    neg_kp, neg_kv = par_ref[0], par_ref[1]
    half_kori, neg_kw = par_ref[2], par_ref[3]
    m, mg, neg_inv_m, g = par_ref[4], par_ref[5], par_ref[6], par_ref[7]
    J = ((par_ref[8], par_ref[9], par_ref[10]),
         (par_ref[11], par_ref[12], par_ref[13]),
         (par_ref[14], par_ref[15], par_ref[16]))

    n_chunks = st_ref.shape[1] // CHUNK

    def chunk_body(ci, carry):
        s0 = pl.multiple_of(ci * CHUNK, CHUNK)
        sl = pl.ds(s0, CHUNK)

        def sc(i): return st_ref[i, sl, :]
        def rc(i): return rf_ref[i, sl, :]
        def rv(i): return (rc(i), rc(i + 1), rc(i + 2))

        position = (sc(0), sc(1), sc(2))
        qx, qy, qz, qw = sc(3), sc(4), sc(5), sc(6)
        vel = (sc(7), sc(8), sc(9))
        wx, wy, wz = sc(10), sc(11), sc(12)
        ang_vel = (wx, wy, wz)

        des_pos, des_vel, des_acc = rv(0), rv(3), rv(6)
        des_acc_dot, des_acc_ddot = rv(9), rv(12)
        ref_b1, ref_b1_dot, ref_b1_ddot = rv(15), rv(18), rv(21)

        # pypose SO3 quaternion (x, y, z, w) -> rotation matrix (normalize first).
        qr = jax.lax.rsqrt(qx * qx + qy * qy + qz * qz + qw * qw)
        x, y, z, w = qx * qr, qy * qr, qz * qr, qw * qr
        R = ((1.0 - 2.0 * (y * y + z * z), 2.0 * (x * y - w * z), 2.0 * (x * z + w * y)),
             (2.0 * (x * y + w * z), 1.0 - 2.0 * (x * x + z * z), 2.0 * (y * z - w * x)),
             (2.0 * (x * z - w * y), 2.0 * (y * z + w * x), 1.0 - 2.0 * (x * x + y * y)))

        err_p = _sub(position, des_pos)
        err_v = _sub(vel, des_vel)

        # TODO(synk): PID integral term omitted — ki == 0 in the reference controller.
        # des_b3 = -(kp*err_p + kv*err_v) - m*g*e3 + m*des_acc   (e3 path specialized)
        des_b3 = (neg_kp * err_p[0] + neg_kv * err_v[0] + m * des_acc[0],
                  neg_kp * err_p[1] + neg_kv * err_v[1] + m * des_acc[1],
                  neg_kp * err_p[2] + neg_kv * err_v[2] + m * des_acc[2] - mg)
        b3 = (R[0][2], R[1][2], R[2][2])
        thrust_des = -_dot(des_b3, b3)

        # err_vel_dot = g*e3 - thrust_des/m * b3 - des_acc
        tnm = thrust_des * neg_inv_m
        err_vel_dot = (tnm * b3[0] - des_acc[0],
                       tnm * b3[1] - des_acc[1],
                       tnm * b3[2] - des_acc[2] + g)
        des_b3_dot = tuple(neg_kp * err_v[i] + neg_kv * err_vel_dot[i]
                           + m * des_acc_dot[i] for i in range(3))
        # b3_dot = R @ vec2skew(ang_vel) @ e3 = R @ (wy, -wx, 0) — direct, no matvec with 0
        b3_dot = (R[0][0] * wy - R[0][1] * wx,
                  R[1][0] * wy - R[1][1] * wx,
                  R[2][0] * wy - R[2][1] * wx)
        thrust_dot = -(_dot(des_b3_dot, b3) + _dot(des_b3, b3_dot))
        # err_vel_ddot = (-thrust_dot*b3 - thrust_des*b3_dot)/m - des_acc_dot
        err_vel_ddot = tuple((thrust_dot * b3[i] + thrust_des * b3_dot[i]) * neg_inv_m
                             - des_acc_dot[i] for i in range(3))
        des_b3_ddot = tuple(neg_kp * err_vel_dot[i] + neg_kv * err_vel_ddot[i]
                            + m * des_acc_ddot[i] for i in range(3))

        des_b3 = _scale(-_rnorm(des_b3), des_b3)
        des_b3_dot = _scale(-_rnorm(des_b3_dot), des_b3_dot)
        des_b3_ddot = _scale(-_rnorm(des_b3_ddot), des_b3_ddot)

        des_b2 = _cross(des_b3, ref_b1)
        des_b2_dot = _add(_cross(des_b3_dot, ref_b1), _cross(des_b3, ref_b1_dot))
        des_b2_ddot = _add(_add(_cross(des_b3_ddot, ref_b1),
                                _scale(2.0, _cross(des_b3_dot, ref_b1_dot))),
                           _cross(des_b3, ref_b1_ddot))

        rn_b2_dot = _rnorm(des_b2_dot)
        rn_b2_ddot = _rnorm(des_b2_ddot)
        des_b2 = _scale(_rnorm(des_b2), des_b2)
        # Faithful to the reference: numerator is the already-normalized des_b2.
        des_b2_dot = _scale(rn_b2_dot, des_b2)
        des_b2_ddot = _scale(rn_b2_ddot, des_b2)

        des_b1 = _cross(des_b2, des_b3)
        des_b1_dot = _add(_cross(des_b2_dot, des_b3), _cross(des_b2, des_b3_dot))
        des_b1_ddot = _add(_add(_cross(des_b2_ddot, des_b3),
                                _scale(2.0, _cross(des_b2_dot, des_b3_dot))),
                           _cross(des_b2, des_b3_ddot))

        rn_b1_dot = _rnorm(des_b1_dot)
        rn_b1_ddot = _rnorm(des_b1_ddot)
        # Faithful to the reference: des_b1 is NOT renormalized; des_b2 is
        # renormalized again and reused as numerator for des_b1_dot / des_b1_ddot.
        des_b2 = _scale(_rnorm(des_b2), des_b2)
        des_b1_dot = _scale(rn_b1_dot, des_b2)
        des_b1_ddot = _scale(rn_b1_ddot, des_b2)

        # des_angular_vel = skew2vec(Rd^T Rd_dot), Rd columns = (b1, b2, b3)
        omega_d = (-_dot(des_b2, des_b3_dot),
                   _dot(des_b1, des_b3_dot),
                   -_dot(des_b1, des_b2_dot))
        # (vec2skew(omega)^2)[i, j] = omega_i * omega_j for i != j
        des_ang_acc = (-(_dot(des_b2, des_b3_ddot) - omega_d[1] * omega_d[2]),
                       (_dot(des_b1, des_b3_ddot) - omega_d[0] * omega_d[2]),
                       -(_dot(des_b1, des_b2_ddot) - omega_d[0] * omega_d[1]))

        # -kori * pose_err folded into half_kori * pe (signs baked into pe terms):
        # pose_err = 0.5 * skew2vec(Rd^T R - R^T Rd)
        r1 = (R[0][0], R[1][0], R[2][0])
        r2 = (R[0][1], R[1][1], R[2][1])
        r3 = b3
        pe0 = _dot(des_b2, r3) - _dot(des_b3, r2)
        pe1 = _dot(des_b3, r1) - _dot(des_b1, r3)
        pe2 = _dot(des_b1, r2) - _dot(des_b2, r1)

        Rd_w = _add(_add(_scale(omega_d[0], des_b1), _scale(omega_d[1], des_b2)),
                    _scale(omega_d[2], des_b3))
        RT_Rd_w = _matTvec(R, Rd_w)
        Rd_a = _add(_add(_scale(des_ang_acc[0], des_b1),
                         _scale(des_ang_acc[1], des_b2)),
                    _scale(des_ang_acc[2], des_b3))
        RT_Rd_a = _matTvec(R, Rd_a)

        err_w = _sub(ang_vel, RT_Rd_w)
        Jw = _matvec(J, ang_vel)
        wxJw = _cross(ang_vel, Jw)
        temp_M = _cross(ang_vel, _sub(RT_Rd_w, RT_Rd_a))
        JtM = _matvec(J, temp_M)

        # Direct lane-dense stores of the (4, CHUNK, LANE) result slab.
        out_ref[0, sl, :] = jnp.maximum(thrust_des, 0.0)
        out_ref[1, sl, :] = half_kori * pe0 + neg_kw * err_w[0] + wxJw[0] - JtM[0]
        out_ref[2, sl, :] = half_kori * pe1 + neg_kw * err_w[1] + wxJw[1] - JtM[1]
        out_ref[3, sl, :] = half_kori * pe2 + neg_kw * err_w[2] + wxJw[2] - JtM[2]
        return carry

    jax.lax.fori_loop(0, n_chunks, chunk_body, 0)


def _choose_block_sublanes(rows_min):
    """Sublanes per grid block: multiple of CHUNK, <= MAX_BLOCK_SUBLANES, and
    leaving >= 2 grid blocks when there is enough work (v7x has 2 TCs)."""
    if rows_min <= 2 * CHUNK:
        return CHUNK
    half = -(-rows_min // 2)
    return min(MAX_BLOCK_SUBLANES, -(-half // CHUNK) * CHUNK)


def geometric_controller_forward(states, ref_states, parameters, mass, J, g):
    """Batched geometric controller.

    states:     (B, 13) [pos(3), quat xyzw(4), vel(3), ang_vel(3)] (or (13,))
    ref_states: (B, 24)                                            (or (24,))
    returns:    (B, 4)  [max(0, thrust), Mx, My, Mz]               (or (4,))
    """
    states = jnp.asarray(states, jnp.float32)
    ref_states = jnp.asarray(ref_states, jnp.float32)
    squeeze = states.ndim == 1
    if squeeze:
        states = states[None]
        ref_states = ref_states[None]

    B = states.shape[0]
    rows_min = -(-B // LANE)
    S = _choose_block_sublanes(rows_min)
    block_elems = S * LANE
    Bp = -(-B // block_elems) * block_elems
    if Bp != B:
        # Edge-pad so padded lanes compute finite (discarded) values; skipped
        # entirely when B is already block-aligned.
        states = jnp.pad(states, ((0, Bp - B), (0, 0)), mode="edge")
        ref_states = jnp.pad(ref_states, ((0, Bp - B), (0, 0)), mode="edge")
    rows = Bp // LANE
    n_blocks = rows // S

    # Component-major / batch-minor layout: each component is a lane+sublane
    # dense tile. Two separate inputs -> no extra concat pass over HBM.
    # TODO(synk): keep this layout persistent across controller calls (or fuse the
    # transpose into the producer) so the per-call repack / output transpose go away.
    st = states.T.reshape(13, rows, LANE)
    rf = ref_states.T.reshape(24, rows, LANE)

    kp, kv, kori, kw = parameters
    mass = float(mass)
    g = float(g)
    par = jnp.concatenate([
        jnp.asarray([-kp, -kv, 0.5 * kori, -kw, mass, mass * g, -1.0 / mass, g],
                    jnp.float32),
        jnp.asarray(J, jnp.float32).reshape(9),
    ])                                                          # (17,) -> SMEM

    out = pl.pallas_call(
        _geometric_controller_kernel,
        out_shape=jax.ShapeDtypeStruct((4, rows, LANE), jnp.float32),
        grid=(n_blocks,),
        in_specs=[
            pl.BlockSpec((13, S, LANE), lambda i: (0, i, 0)),
            pl.BlockSpec((24, S, LANE), lambda i: (0, i, 0)),
            pl.BlockSpec(memory_space=pltpu.MemorySpace.SMEM),
        ],
        out_specs=pl.BlockSpec((4, S, LANE), lambda i: (0, i, 0)),
        compiler_params=pltpu.CompilerParams(
            dimension_semantics=("parallel",),      # shards blocks across TCs on v7x
            vmem_limit_bytes=48 * 1024 * 1024,      # fits large tiles on v5e, < v7x 64 MiB
        ),
    )(st, rf, par)

    out = out.reshape(4, Bp).T[:B]                              # (B, 4)
    return out[0] if squeeze else out


if __name__ == "__main__":
    key = jax.random.PRNGKey(0)
    k1, k2 = jax.random.split(key)

    B = 8192   # -> S=32 sublanes/block, 2 parallel blocks, 4 inner chunks per block
    raw = jax.random.normal(k1, (B, 13), dtype=jnp.float32)
    quat = raw[:, 3:7]
    quat = quat / jnp.linalg.norm(quat, axis=1, keepdims=True)  # pypose SO3 (x,y,z,w)
    states = jnp.concatenate([raw[:, 0:3], quat, raw[:, 7:13]], axis=1)
    ref_states = jax.random.normal(k2, (B, 24), dtype=jnp.float32)

    parameters = (16.0, 5.6, 8.81, 2.54)   # kp, kv, kori, kw
    mass = 0.18
    g = 9.81
    J = jnp.array([[0.0829, 0.0, 0.0],
                   [0.0, 0.0845, 0.0],
                   [0.0, 0.0, 0.1377]], dtype=jnp.float32)

    out = geometric_controller_forward(states, ref_states, parameters, mass, J, g)
    out = jax.block_until_ready(out)
    assert out.shape == (B, 4)
    assert bool(jnp.all(jnp.isfinite(out)))
    print("KERNEL_OK")
</pallas_src>

<mosaic_0001>
module attributes {stable_mosaic.version = 11 : i64} {
  func.func @_geometric_controller_kernel(%arg0: i32, %arg1: memref<13x32x128xf32, #tpu.memory_space<vmem>>, %arg2: memref<24x32x128xf32, #tpu.memory_space<vmem>>, %arg3: memref<17xf32, #tpu.memory_space<smem>>, %arg4: memref<4x32x128xf32, #tpu.memory_space<vmem>>) attributes {dimension_semantics = [#tpu.dimension_semantics<parallel>], iteration_bounds = array<i64: 2>, scalar_prefetch = 0 : i64, scratch_operands = 0 : i64, tpu.core_type = #tpu.core_type<tc>, window_params = [{transform_indices = @transform_0, window_bounds = array<i64: 13, 32, 128>}, {transform_indices = @transform_1, window_bounds = array<i64: 24, 32, 128>}, {transform_indices = @transform_2, window_bounds = array<i64: 17>}, {transform_indices = @transform_3, window_bounds = array<i64: 4, 32, 128>}]} {
    %c0 = arith.constant 0 : index
    %0 = memref.load %arg3[%c0] : memref<17xf32, #tpu.memory_space<smem>>
    %c1 = arith.constant 1 : index
    %1 = memref.load %arg3[%c1] : memref<17xf32, #tpu.memory_space<smem>>
    %c2 = arith.constant 2 : index
    %2 = memref.load %arg3[%c2] : memref<17xf32, #tpu.memory_space<smem>>
    %c3 = arith.constant 3 : index
    %3 = memref.load %arg3[%c3] : memref<17xf32, #tpu.memory_space<smem>>
    %c4 = arith.constant 4 : index
    %4 = memref.load %arg3[%c4] : memref<17xf32, #tpu.memory_space<smem>>
    %c5 = arith.constant 5 : index
    %5 = memref.load %arg3[%c5] : memref<17xf32, #tpu.memory_space<smem>>
    %c6 = arith.constant 6 : index
    %6 = memref.load %arg3[%c6] : memref<17xf32, #tpu.memory_space<smem>>
    %c7 = arith.constant 7 : index
    %7 = memref.load %arg3[%c7] : memref<17xf32, #tpu.memory_space<smem>>
    %c8 = arith.constant 8 : index
    %8 = memref.load %arg3[%c8] : memref<17xf32, #tpu.memory_space<smem>>
    %c9 = arith.constant 9 : index
    %9 = memref.load %arg3[%c9] : memref<17xf32, #tpu.memory_space<smem>>
    %c10 = arith.constant 10 : index
    %10 = memref.load %arg3[%c10] : memref<17xf32, #tpu.memory_space<smem>>
    %c11 = arith.constant 11 : index
    %11 = memref.load %arg3[%c11] : memref<17xf32, #tpu.memory_space<smem>>
    %c12 = arith.constant 12 : index
    %12 = memref.load %arg3[%c12] : memref<17xf32, #tpu.memory_space<smem>>
    %c13 = arith.constant 13 : index
    %13 = memref.load %arg3[%c13] : memref<17xf32, #tpu.memory_space<smem>>
    %c14 = arith.constant 14 : index
    %14 = memref.load %arg3[%c14] : memref<17xf32, #tpu.memory_space<smem>>
    %c15 = arith.constant 15 : index
    %15 = memref.load %arg3[%c15] : memref<17xf32, #tpu.memory_space<smem>>
    %c16 = arith.constant 16 : index
    %16 = memref.load %arg3[%c16] : memref<17xf32, #tpu.memory_space<smem>>
    %c0_i32 = arith.constant 0 : i32
    %c4_i32 = arith.constant 4 : i32
    %17 = arith.addi %c0_i32, %c4_i32 : i32
    %c1_i32 = arith.constant 1 : i32
    scf.for %arg5 = %c0_i32 to %17 step %c1_i32  : i32 {
      %c8_i32 = arith.constant 8 : i32
      %18 = arith.muli %arg5, %c8_i32 : i32
      %19 = tpu.assume_multiple %18, 8 : i32
      %c0_1 = arith.constant 0 : index
      %20 = arith.index_cast %19 : i32 to index
      %c0_2 = arith.constant 0 : index
      %21 = vector.load %arg1[%c0_1, %20, %c0_2] : memref<13x32x128xf32, #tpu.memory_space<vmem>>, vector<1x8x128xf32>
      %22 = vector.shape_cast %21 : vector<1x8x128xf32> to vector<8x128xf32>
      %c1_3 = arith.constant 1 : index
      %23 = arith.index_cast %19 : i32 to index
      %c0_4 = arith.constant 0 : index
      %24 = vector.load %arg1[%c1_3, %23, %c0_4] : memref<13x32x128xf32, #tpu.memory_space<vmem>>, vector<1x8x128xf32>
      %25 = vector.shape_cast %24 : vector<1x8x128xf32> to vector<8x128xf32>
      %c2_5 = arith.constant 2 : index
      %26 = arith.index_cast %19 : i32 to index
      %c0_6 = arith.constant 0 : index
      %27 = vector.load %arg1[%c2_5, %26, %c0_6] : memref<13x32x128xf32, #tpu.memory_space<vmem>>, vector<1x8x128xf32>
      %28 = vector.shape_cast %27 : vector<1x8x128xf32> to vector<8x128xf32>
      %c3_7 = arith.constant 3 : index
      %29 = arith.index_cast %19 : i32 to index
      %c0_8 = arith.constant 0 : index
      %30 = vector.load %arg1[%c3_7, %29, %c0_8] : memref<13x32x128xf32, #tpu.memory_space<vmem>>, vector<1x8x128xf32>
      %31 = vector.shape_cast %30 : vector<1x8x128xf32> to vector<8x128xf32>
      %c4_9 = arith.constant 4 : index
      %32 = arith.index_cast %19 : i32 to index
      %c0_10 = arith.constant 0 : index
      %33 = vector.load %arg1[%c4_9, %32, %c0_10] : memref<13x32x128xf32, #tpu.memory_space<vmem>>, vector<1x8x128xf32>
      %34 = vector.shape_cast %33 : vector<1x8x128xf32> to vector<8x128xf32>
      %c5_11 = arith.constant 5 : index
      %35 = arith.index_cast %19 : i32 to index
      %c0_12 = arith.constant 0 : index
      %36 = vector.load %arg1[%c5_11, %35, %c0_12] : memref<13x32x128xf32, #tpu.memory_space<vmem>>, vector<1x8x128xf32>
      %37 = vector.shape_cast %36 : vector<1x8x128xf32> to vector<8x128xf32>
      %c6_13 = arith.constant 6 : index
      %38 = arith.index_cast %19 : i32 to index
      %c0_14 = arith.constant 0 : index
      %39 = vector.load %arg1[%c6_13, %38, %c0_14] : memref<13x32x128xf32, #tpu.memory_space<vmem>>, vector<1x8x128xf32>
      %40 = vector.shape_cast %39 : vector<1x8x128xf32> to vector<8x128xf32>
      %c7_15 = arith.constant 7 : index
      %41 = arith.index_cast %19 : i32 to index
      %c0_16 = arith.constant 0 : index
      %42 = vector.load %arg1[%c7_15, %41, %c0_16] : memref<13x32x128xf32, #tpu.memory_space<vmem>>, vector<1x8x128xf32>
      %43 = vector.shape_cast %42 : vector<1x8x128xf32> to vector<8x128xf32>
      %c8_17 = arith.constant 8 : index
      %44 = arith.index_cast %19 : i32 to index
      %c0_18 = arith.constant 0 : index
      %45 = vector.load %arg1[%c8_17, %44, %c0_18] : memref<13x32x128xf32, #tpu.memory_space<vmem>>, vector<1x8x128xf32>
      %46 = vector.shape_cast %45 : vector<1x8x128xf32> to vector<8x128xf32>
      %c9_19 = arith.constant 9 : index
      %47 = arith.index_cast %19 : i32 to index
      %c0_20 = arith.constant 0 : index
      %48 = vector.load %arg1[%c9_19, %47, %c0_20] : memref<13x32x128xf32, #tpu.memory_space<vmem>>, vector<1x8x128xf32>
      %49 = vector.shape_cast %48 : vector<1x8x128xf32> to vector<8x128xf32>
      %c10_21 = arith.constant 10 : index
      %50 = arith.index_cast %19 : i32 to index
      %c0_22 = arith.constant 0 : index
      %51 = vector.load %arg1[%c10_21, %50, %c0_22] : memref<13x32x128xf32, #tpu.memory_space<vmem>>, vector<1x8x128xf32>
      %52 = vector.shape_cast %51 : vector<1x8x128xf32> to vector<8x128xf32>
      %c11_23 = arith.constant 11 : index
      %53 = arith.index_cast %19 : i32 to index
      %c0_24 = arith.constant 0 : index
      %54 = vector.load %arg1[%c11_23, %53, %c0_24] : memref<13x32x128xf32, #tpu.memory_space<vmem>>, vector<1x8x128xf32>
      %55 = vector.shape_cast %54 : vector<1x8x128xf32> to vector<8x128xf32>
      %c12_25 = arith.constant 12 : index
      %56 = arith.index_cast %19 : i32 to index
      %c0_26 = arith.constant 0 : index
      %57 = vector.load %arg1[%c12_25, %56, %c0_26] : memref<13x32x128xf32, #tpu.memory_space<vmem>>, vector<1x8x128xf32>
      %58 = vector.shape_cast %57 : vector<1x8x128xf32> to vector<8x128xf32>
      %c0_27 = arith.constant 0 : index
      %59 = arith.index_cast %19 : i32 to index
      %c0_28 = arith.constant 0 : index
      %60 = vector.load %arg2[%c0_27, %59, %c0_28] : memref<24x32x128xf32, #tpu.memory_space<vmem>>, vector<1x8x128xf32>
      %61 = vector.shape_cast %60 : vector<1x8x128xf32> to vector<8x128xf32>
      %c1_29 = arith.constant 1 : index
      %62 = arith.index_cast %19 : i32 to index
      %c0_30 = arith.constant 0 : index
      %63 = vector.load %arg2[%c1_29, %62, %c0_30] : memref<24x32x128xf32, #tpu.memory_space<vmem>>, vector<1x8x128xf32>
      %64 = vector.shape_cast %63 : vector<1x8x128xf32> to vector<8x128xf32>
      %c2_31 = arith.constant 2 : index
      %65 = arith.index_cast %19 : i32 to index
      %c0_32 = arith.constant 0 : index
      %66 = vector.load %arg2[%c2_31, %65, %c0_32] : memref<24x32x128xf32, #tpu.memory_space<vmem>>, vector<1x8x128xf32>
      %67 = vector.shape_cast %66 : vector<1x8x128xf32> to vector<8x128xf32>
      %c3_33 = arith.constant 3 : index
      %68 = arith.index_cast %19 : i32 to index
      %c0_34 = arith.constant 0 : index
      %69 = vector.load %arg2[%c3_33, %68, %c0_34] : memref<24x32x128xf32, #tpu.memory_space<vmem>>, vector<1x8x128xf32>
      %70 = vector.shape_cast %69 : vector<1x8x128xf32> to vector<8x128xf32>
      %c4_35 = arith.constant 4 : index
      %71 = arith.index_cast %19 : i32 to index
      %c0_36 = arith.constant 0 : index
      %72 = vector.load %arg2[%c4_35, %71, %c0_36] : memref<24x32x128xf32, #tpu.memory_space<vmem>>, vector<1x8x128xf32>
      %73 = vector.shape_cast %72 : vector<1x8x128xf32> to vector<8x128xf32>
      %c5_37 = arith.constant 5 : index
      %74 = arith.index_cast %19 : i32 to index
      %c0_38 = arith.constant 0 : index
      %75 = vector.load %arg2[%c5_37, %74, %c0_38] : memref<24x32x128xf32, #tpu.memory_space<vmem>>, vector<1x8x128xf32>
      %76 = vector.shape_cast %75 : vector<1x8x128xf32> to vector<8x128xf32>
      %c6_39 = arith.constant 6 : index
      %77 = arith.index_cast %19 : i32 to index
      %c0_40 = arith.constant 0 : index
      %78 = vector.load %arg2[%c6_39, %77, %c0_40] : memref<24x32x128xf32, #tpu.memory_space<vmem>>, vector<1x8x128xf32>
      %79 = vector.shape_cast %78 : vector<1x8x128xf32> to vector<8x128xf32>
      %c7_41 = arith.constant 7 : index
      %80 = arith.index_cast %19 : i32 to index
      %c0_42 = arith.constant 0 : index
      %81 = vector.load %arg2[%c7_41, %80, %c0_42] : memref<24x32x128xf32, #tpu.memory_space<vmem>>, vector<1x8x128xf32>
      %82 = vector.shape_cast %81 : vector<1x8x128xf32> to vector<8x128xf32>
      %c8_43 = arith.constant 8 : index
      %83 = arith.index_cast %19 : i32 to index
      %c0_44 = arith.constant 0 : index
      %84 = vector.load %arg2[%c8_43, %83, %c0_44] : memref<24x32x128xf32, #tpu.memory_space<vmem>>, vector<1x8x128xf32>
      %85 = vector.shape_cast %84 : vector<1x8x128xf32> to vector<8x128xf32>
      %c9_45 = arith.constant 9 : index
      %86 = arith.index_cast %19 : i32 to index
      %c0_46 = arith.constant 0 : index
      %87 = vector.load %arg2[%c9_45, %86, %c0_46] : memref<24x32x128xf32, #tpu.memory_space<vmem>>, vector<1x8x128xf32>
      %88 = vector.shape_cast %87 : vector<1x8x128xf32> to vector<8x128xf32>
      %c10_47 = arith.constant 10 : index
      %89 = arith.index_cast %19 : i32 to index
      %c0_48 = arith.constant 0 : index
      %90 = vector.load %arg2[%c10_47, %89, %c0_48] : memref<24x32x128xf32, #tpu.memory_space<vmem>>, vector<1x8x128xf32>
      %91 = vector.shape_cast %90 : vector<1x8x128xf32> to vector<8x128xf32>
      %c11_49 = arith.constant 11 : index
      %92 = arith.index_cast %19 : i32 to index
      %c0_50 = arith.constant 0 : index
      %93 = vector.load %arg2[%c11_49, %92, %c0_50] : memref<24x32x128xf32, #tpu.memory_space<vmem>>, vector<1x8x128xf32>
      %94 = vector.shape_cast %93 : vector<1x8x128xf32> to vector<8x128xf32>
      %c12_51 = arith.constant 12 : index
      %95 = arith.index_cast %19 : i32 to index
      %c0_52 = arith.constant 0 : index
      %96 = vector.load %arg2[%c12_51, %95, %c0_52] : memref<24x32x128xf32, #tpu.memory_space<vmem>>, vector<1x8x128xf32>
      %97 = vector.shape_cast %96 : vector<1x8x128xf32> to vector<8x128xf32>
      %c13_53 = arith.constant 13 : index
      %98 = arith.index_cast %19 : i32 to index
      %c0_54 = arith.constant 0 : index
      %99 = vector.load %arg2[%c13_53, %98, %c0_54] : memref<24x32x128xf32, #tpu.memory_space<vmem>>, vector<1x8x128xf32>
      %100 = vector.shape_cast %99 : vector<1x8x128xf32> to vector<8x128xf32>
      %c14_55 = arith.constant 14 : index
      %101 = arith.index_cast %19 : i32 to index
      %c0_56 = arith.constant 0 : index
      %102 = vector.load %arg2[%c14_55, %101, %c0_56] : memref<24x32x128xf32, #tpu.memory_space<vmem>>, vector<1x8x128xf32>
      %103 = vector.shape_cast %102 : vector<1x8x128xf32> to vector<8x128xf32>
      %c15_57 = arith.constant 15 : index
      %104 = arith.index_cast %19 : i32 to index
      %c0_58 = arith.constant 0 : index
      %105 = vector.load %arg2[%c15_57, %104, %c0_58] : memref<24x32x128xf32, #tpu.memory_space<vmem>>, vector<1x8x128xf32>
      %106 = vector.shape_cast %105 : vector<1x8x128xf32> to vector<8x128xf32>
      %c16_59 = arith.constant 16 : index
      %107 = arith.index_cast %19 : i32 to index
      %c0_60 = arith.constant 0 : index
      %108 = vector.load %arg2[%c16_59, %107, %c0_60] : memref<24x32x128xf32, #tpu.memory_space<vmem>>, vector<1x8x128xf32>
      %109 = vector.shape_cast %108 : vector<1x8x128xf32> to vector<8x128xf32>
      %c17 = arith.constant 17 : index
      %110 = arith.index_cast %19 : i32 to index
      %c0_61 = arith.constant 0 : index
      %111 = vector.load %arg2[%c17, %110, %c0_61] : memref<24x32x128xf32, #tpu.memory_space<vmem>>, vector<1x8x128xf32>
      %112 = vector.shape_cast %111 : vector<1x8x128xf32> to vector<8x128xf32>
      %c18 = arith.constant 18 : index
      %113 = arith.index_cast %19 : i32 to index
      %c0_62 = arith.constant 0 : index
      %114 = vector.load %arg2[%c18, %113, %c0_62] : memref<24x32x128xf32, #tpu.memory_space<vmem>>, vector<1x8x128xf32>
      %115 = vector.shape_cast %114 : vector<1x8x128xf32> to vector<8x128xf32>
      %c19 = arith.constant 19 : index
      %116 = arith.index_cast %19 : i32 to index
      %c0_63 = arith.constant 0 : index
      %117 = vector.load %arg2[%c19, %116, %c0_63] : memref<24x32x128xf32, #tpu.memory_space<vmem>>, vector<1x8x128xf32>
      %118 = vector.shape_cast %117 : vector<1x8x128xf32> to vector<8x128xf32>
      %c20 = arith.constant 20 : index
      %119 = arith.index_cast %19 : i32 to index
      %c0_64 = arith.constant 0 : index
      %120 = vector.load %arg2[%c20, %119, %c0_64] : memref<24x32x128xf32, #tpu.memory_space<vmem>>, vector<1x8x128xf32>
      %121 = vector.shape_cast %120 : vector<1x8x128xf32> to vector<8x128xf32>
      %c21 = arith.constant 21 : index
      %122 = arith.index_cast %19 : i32 to index
      %c0_65 = arith.constant 0 : index
      %123 = vector.load %arg2[%c21, %122, %c0_65] : memref<24x32x128xf32, #tpu.memory_space<vmem>>, vector<1x8x128xf32>
      %124 = vector.shape_cast %123 : vector<1x8x128xf32> to vector<8x128xf32>
      %c22 = arith.constant 22 : index
      %125 = arith.index_cast %19 : i32 to index
      %c0_66 = arith.constant 0 : index
      %126 = vector.load %arg2[%c22, %125, %c0_66] : memref<24x32x128xf32, #tpu.memory_space<vmem>>, vector<1x8x128xf32>
      %127 = vector.shape_cast %126 : vector<1x8x128xf32> to vector<8x128xf32>
      %c23 = arith.constant 23 : index
      %128 = arith.index_cast %19 : i32 to index
      %c0_67 = arith.constant 0 : index
      %129 = vector.load %arg2[%c23, %128, %c0_67] : memref<24x32x128xf32, #tpu.memory_space<vmem>>, vector<1x8x128xf32>
      %130 = vector.shape_cast %129 : vector<1x8x128xf32> to vector<8x128xf32>
      %131 = arith.mulf %31, %31 : vector<8x128xf32>
      %132 = arith.mulf %34, %34 : vector<8x128xf32>
      %133 = arith.addf %131, %132 : vector<8x128xf32>
      %134 = arith.mulf %37, %37 : vector<8x128xf32>
      %135 = arith.addf %133, %134 : vector<8x128xf32>
      %136 = arith.mulf %40, %40 : vector<8x128xf32>
      %137 = arith.addf %135, %136 : vector<8x128xf32>
      %138 = math.rsqrt %137 : vector<8x128xf32>
      %139 = arith.mulf %31, %138 : vector<8x128xf32>
      %140 = arith.mulf %34, %138 : vector<8x128xf32>
      %141 = arith.mulf %37, %138 : vector<8x128xf32>
      %142 = arith.mulf %40, %138 : vector<8x128xf32>
      %143 = arith.mulf %140, %140 : vector<8x128xf32>
      %144 = arith.mulf %141, %141 : vector<8x128xf32>
      %145 = arith.addf %143, %144 : vector<8x128xf32>
      %cst = arith.constant 2.000000e+00 : f32
      %146 = vector.broadcast %cst : f32 to vector<8x128xf32>
      %147 = arith.mulf %146, %145 : vector<8x128xf32>
      %cst_68 = arith.constant 1.000000e+00 : f32
      %148 = vector.broadcast %cst_68 : f32 to vector<8x128xf32>
      %149 = arith.subf %148, %147 : vector<8x128xf32>
      %150 = arith.mulf %139, %140 : vector<8x128xf32>
      %151 = arith.mulf %142, %141 : vector<8x128xf32>
      %152 = arith.subf %150, %151 : vector<8x128xf32>
      %cst_69 = arith.constant 2.000000e+00 : f32
      %153 = vector.broadcast %cst_69 : f32 to vector<8x128xf32>
      %154 = arith.mulf %153, %152 : vector<8x128xf32>
      %155 = arith.mulf %139, %141 : vector<8x128xf32>
      %156 = arith.mulf %142, %140 : vector<8x128xf32>
      %157 = arith.addf %155, %156 : vector<8x128xf32>
      %cst_70 = arith.constant 2.000000e+00 : f32
      %158 = vector.broadcast %cst_70 : f32 to vector<8x128xf32>
      %159 = arith.mulf %158, %157 : vector<8x128xf32>
      %160 = arith.mulf %139, %140 : vector<8x128xf32>
      %161 = arith.mulf %142, %141 : vector<8x128xf32>
      %162 = arith.addf %160, %161 : vector<8x128xf32>
      %cst_71 = arith.constant 2.000000e+00 : f32
      %163 = vector.broadcast %cst_71 : f32 to vector<8x128xf32>
      %164 = arith.mulf %163, %162 : vector<8x128xf32>
      %165 = arith.mulf %139, %139 : vector<8x128xf32>
      %166 = arith.mulf %141, %141 : vector<8x128xf32>
      %167 = arith.addf %165, %166 : vector<8x128xf32>
      %cst_72 = arith.constant 2.000000e+00 : f32
      %168 = vector.broadcast %cst_72 : f32 to vector<8x128xf32>
      %169 = arith.mulf %168, %167 : vector<8x128xf32>
      %cst_73 = arith.constant 1.000000e+00 : f32
      %170 = vector.broadcast %cst_73 : f32 to vector<8x128xf32>
      %171 = arith.subf %170, %169 : vector<8x128xf32>
      %172 = arith.mulf %140, %141 : vector<8x128xf32>
      %173 = arith.mulf %142, %139 : vector<8x128xf32>
      %174 = arith.subf %172, %173 : vector<8x128xf32>
      %cst_74 = arith.constant 2.000000e+00 : f32
      %175 = vector.broadcast %cst_74 : f32 to vector<8x128xf32>
      %176 = arith.mulf %175, %174 : vector<8x128xf32>
      %177 = arith.mulf %139, %141 : vector<8x128xf32>
      %178 = arith.mulf %142, %140 : vector<8x128xf32>
      %179 = arith.subf %177, %178 : vector<8x128xf32>
      %cst_75 = arith.constant 2.000000e+00 : f32
      %180 = vector.broadcast %cst_75 : f32 to vector<8x128xf32>
      %181 = arith.mulf %180, %179 : vector<8x128xf32>
      %182 = arith.mulf %140, %141 : vector<8x128xf32>
      %183 = arith.mulf %142, %139 : vector<8x128xf32>
      %184 = arith.addf %182, %183 : vector<8x128xf32>
      %cst_76 = arith.constant 2.000000e+00 : f32
      %185 = vector.broadcast %cst_76 : f32 to vector<8x128xf32>
      %186 = arith.mulf %185, %184 : vector<8x128xf32>
      %187 = arith.mulf %139, %139 : vector<8x128xf32>
      %188 = arith.mulf %140, %140 : vector<8x128xf32>
      %189 = arith.addf %187, %188 : vector<8x128xf32>
      %cst_77 = arith.constant 2.000000e+00 : f32
      %190 = vector.broadcast %cst_77 : f32 to vector<8x128xf32>
      %191 = arith.mulf %190, %189 : vector<8x128xf32>
      %cst_78 = arith.constant 1.000000e+00 : f32
      %192 = vector.broadcast %cst_78 : f32 to vector<8x128xf32>
      %193 = arith.subf %192, %191 : vector<8x128xf32>
      %194 = arith.subf %22, %61 : vector<8x128xf32>
      %195 = arith.subf %25, %64 : vector<8x128xf32>
      %196 = arith.subf %28, %67 : vector<8x128xf32>
      %197 = arith.subf %43, %70 : vector<8x128xf32>
      %198 = arith.subf %46, %73 : vector<8x128xf32>
      %199 = arith.subf %49, %76 : vector<8x128xf32>
      %200 = vector.broadcast %0 : f32 to vector<8x128xf32>
      %201 = arith.mulf %200, %194 : vector<8x128xf32>
      %202 = vector.broadcast %1 : f32 to vector<8x128xf32>
      %203 = arith.mulf %202, %197 : vector<8x128xf32>
      %204 = arith.addf %201, %203 : vector<8x128xf32>
      %205 = vector.broadcast %4 : f32 to vector<8x128xf32>
      %206 = arith.mulf %205, %79 : vector<8x128xf32>
      %207 = arith.addf %204, %206 : vector<8x128xf32>
      %208 = vector.broadcast %0 : f32 to vector<8x128xf32>
      %209 = arith.mulf %208, %195 : vector<8x128xf32>
      %210 = vector.broadcast %1 : f32 to vector<8x128xf32>
      %211 = arith.mulf %210, %198 : vector<8x128xf32>
      %212 = arith.addf %209, %211 : vector<8x128xf32>
      %213 = vector.broadcast %4 : f32 to vector<8x128xf32>
      %214 = arith.mulf %213, %82 : vector<8x128xf32>
      %215 = arith.addf %212, %214 : vector<8x128xf32>
      %216 = vector.broadcast %0 : f32 to vector<8x128xf32>
      %217 = arith.mulf %216, %196 : vector<8x128xf32>
      %218 = vector.broadcast %1 : f32 to vector<8x128xf32>
      %219 = arith.mulf %218, %199 : vector<8x128xf32>
      %220 = arith.addf %217, %219 : vector<8x128xf32>
      %221 = vector.broadcast %4 : f32 to vector<8x128xf32>
      %222 = arith.mulf %221, %85 : vector<8x128xf32>
      %223 = arith.addf %220, %222 : vector<8x128xf32>
      %224 = vector.broadcast %5 : f32 to vector<8x128xf32>
      %225 = arith.subf %223, %224 : vector<8x128xf32>
      %226 = arith.mulf %207, %159 : vector<8x128xf32>
      %227 = arith.mulf %215, %176 : vector<8x128xf32>
      %228 = arith.addf %226, %227 : vector<8x128xf32>
      %229 = arith.mulf %225, %193 : vector<8x128xf32>
      %230 = arith.addf %228, %229 : vector<8x128xf32>
      %cst_79 = arith.constant 0.000000e+00 : f32
      %231 = vector.broadcast %cst_79 : f32 to vector<8x128xf32>
      %232 = arith.subf %231, %230 : vector<8x128xf32>
      %233 = vector.broadcast %6 : f32 to vector<8x128xf32>
      %234 = arith.mulf %232, %233 : vector<8x128xf32>
      %235 = arith.mulf %234, %159 : vector<8x128xf32>
      %236 = arith.subf %235, %79 : vector<8x128xf32>
      %237 = arith.mulf %234, %176 : vector<8x128xf32>
      %238 = arith.subf %237, %82 : vector<8x128xf32>
      %239 = arith.mulf %234, %193 : vector<8x128xf32>
      %240 = arith.subf %239, %85 : vector<8x128xf32>
      %241 = vector.broadcast %7 : f32 to vector<8x128xf32>
      %242 = arith.addf %240, %241 : vector<8x128xf32>
      %243 = vector.broadcast %0 : f32 to vector<8x128xf32>
      %244 = arith.mulf %243, %197 : vector<8x128xf32>
      %245 = vector.broadcast %1 : f32 to vector<8x128xf32>
      %246 = arith.mulf %245, %236 : vector<8x128xf32>
      %247 = arith.addf %244, %246 : vector<8x128xf32>
      %248 = vector.broadcast %4 : f32 to vector<8x128xf32>
      %249 = arith.mulf %248, %88 : vector<8x128xf32>
      %250 = arith.addf %247, %249 : vector<8x128xf32>
      %251 = vector.broadcast %0 : f32 to vector<8x128xf32>
      %252 = arith.mulf %251, %198 : vector<8x128xf32>
      %253 = vector.broadcast %1 : f32 to vector<8x128xf32>
      %254 = arith.mulf %253, %238 : vector<8x128xf32>
      %255 = arith.addf %252, %254 : vector<8x128xf32>
      %256 = vector.broadcast %4 : f32 to vector<8x128xf32>
      %257 = arith.mulf %256, %91 : vector<8x128xf32>
      %258 = arith.addf %255, %257 : vector<8x128xf32>
      %259 = vector.broadcast %0 : f32 to vector<8x128xf32>
      %260 = arith.mulf %259, %199 : vector<8x128xf32>
      %261 = vector.broadcast %1 : f32 to vector<8x128xf32>
      %262 = arith.mulf %261, %242 : vector<8x128xf32>
      %263 = arith.addf %260, %262 : vector<8x128xf32>
      %264 = vector.broadcast %4 : f32 to vector<8x128xf32>
      %265 = arith.mulf %264, %94 : vector<8x128xf32>
      %266 = arith.addf %263, %265 : vector<8x128xf32>
      %267 = arith.mulf %149, %55 : vector<8x128xf32>
      %268 = arith.mulf %154, %52 : vector<8x128xf32>
      %269 = arith.subf %267, %268 : vector<8x128xf32>
      %270 = arith.mulf %164, %55 : vector<8x128xf32>
      %271 = arith.mulf %171, %52 : vector<8x128xf32>
      %272 = arith.subf %270, %271 : vector<8x128xf32>
      %273 = arith.mulf %181, %55 : vector<8x128xf32>
      %274 = arith.mulf %186, %52 : vector<8x128xf32>
      %275 = arith.subf %273, %274 : vector<8x128xf32>
      %276 = arith.mulf %250, %159 : vector<8x128xf32>
      %277 = arith.mulf %258, %176 : vector<8x128xf32>
      %278 = arith.addf %276, %277 : vector<8x128xf32>
      %279 = arith.mulf %266, %193 : vector<8x128xf32>
      %280 = arith.addf %278, %279 : vector<8x128xf32>
      %281 = arith.mulf %207, %269 : vector<8x128xf32>
      %282 = arith.mulf %215, %272 : vector<8x128xf32>
      %283 = arith.addf %281, %282 : vector<8x128xf32>
      %284 = arith.mulf %225, %275 : vector<8x128xf32>
      %285 = arith.addf %283, %284 : vector<8x128xf32>
      %286 = arith.addf %280, %285 : vector<8x128xf32>
      %cst_80 = arith.constant 0.000000e+00 : f32
      %287 = vector.broadcast %cst_80 : f32 to vector<8x128xf32>
      %288 = arith.subf %287, %286 : vector<8x128xf32>
      %289 = arith.mulf %288, %159 : vector<8x128xf32>
      %290 = arith.mulf %232, %269 : vector<8x128xf32>
      %291 = arith.addf %289, %290 : vector<8x128xf32>
      %292 = vector.broadcast %6 : f32 to vector<8x128xf32>
      %293 = arith.mulf %291, %292 : vector<8x128xf32>
      %294 = arith.subf %293, %88 : vector<8x128xf32>
      %295 = arith.mulf %288, %176 : vector<8x128xf32>
      %296 = arith.mulf %232, %272 : vector<8x128xf32>
      %297 = arith.addf %295, %296 : vector<8x128xf32>
      %298 = vector.broadcast %6 : f32 to vector<8x128xf32>
      %299 = arith.mulf %297, %298 : vector<8x128xf32>
      %300 = arith.subf %299, %91 : vector<8x128xf32>
      %301 = arith.mulf %288, %193 : vector<8x128xf32>
      %302 = arith.mulf %232, %275 : vector<8x128xf32>
      %303 = arith.addf %301, %302 : vector<8x128xf32>
      %304 = vector.broadcast %6 : f32 to vector<8x128xf32>
      %305 = arith.mulf %303, %304 : vector<8x128xf32>
      %306 = arith.subf %305, %94 : vector<8x128xf32>
      %307 = vector.broadcast %0 : f32 to vector<8x128xf32>
      %308 = arith.mulf %307, %236 : vector<8x128xf32>
      %309 = vector.broadcast %1 : f32 to vector<8x128xf32>
      %310 = arith.mulf %309, %294 : vector<8x128xf32>
      %311 = arith.addf %308, %310 : vector<8x128xf32>
      %312 = vector.broadcast %4 : f32 to vector<8x128xf32>
      %313 = arith.mulf %312, %97 : vector<8x128xf32>
      %314 = arith.addf %311, %313 : vector<8x128xf32>
      %315 = vector.broadcast %0 : f32 to vector<8x128xf32>
      %316 = arith.mulf %315, %238 : vector<8x128xf32>
      %317 = vector.broadcast %1 : f32 to vector<8x128xf32>
      %318 = arith.mulf %317, %300 : vector<8x128xf32>
      %319 = arith.addf %316, %318 : vector<8x128xf32>
      %320 = vector.broadcast %4 : f32 to vector<8x128xf32>
      %321 = arith.mulf %320, %100 : vector<8x128xf32>
      %322 = arith.addf %319, %321 : vector<8x128xf32>
      %323 = vector.broadcast %0 : f32 to vector<8x128xf32>
      %324 = arith.mulf %323, %242 : vector<8x128xf32>
      %325 = vector.broadcast %1 : f32 to vector<8x128xf32>
      %326 = arith.mulf %325, %306 : vector<8x128xf32>
      %327 = arith.addf %324, %326 : vector<8x128xf32>
      %328 = vector.broadcast %4 : f32 to vector<8x128xf32>
      %329 = arith.mulf %328, %103 : vector<8x128xf32>
      %330 = arith.addf %327, %329 : vector<8x128xf32>
      %331 = arith.mulf %207, %207 : vector<8x128xf32>
      %332 = arith.mulf %215, %215 : vector<8x128xf32>
      %333 = arith.addf %331, %332 : vector<8x128xf32>
      %334 = arith.mulf %225, %225 : vector<8x128xf32>
      %335 = arith.addf %333, %334 : vector<8x128xf32>
      %336 = math.rsqrt %335 : vector<8x128xf32>
      %cst_81 = arith.constant 0.000000e+00 : f32
      %337 = vector.broadcast %cst_81 : f32 to vector<8x128xf32>
      %338 = arith.subf %337, %336 : vector<8x128xf32>
      %339 = arith.mulf %338, %207 : vector<8x128xf32>
      %340 = arith.mulf %338, %215 : vector<8x128xf32>
      %341 = arith.mulf %338, %225 : vector<8x128xf32>
      %342 = arith.mulf %250, %250 : vector<8x128xf32>
      %343 = arith.mulf %258, %258 : vector<8x128xf32>
      %344 = arith.addf %342, %343 : vector<8x128xf32>
      %345 = arith.mulf %266, %266 : vector<8x128xf32>
      %346 = arith.addf %344, %345 : vector<8x128xf32>
      %347 = math.rsqrt %346 : vector<8x128xf32>
      %cst_82 = arith.constant 0.000000e+00 : f32
      %348 = vector.broadcast %cst_82 : f32 to vector<8x128xf32>
      %349 = arith.subf %348, %347 : vector<8x128xf32>
      %350 = arith.mulf %349, %250 : vector<8x128xf32>
      %351 = arith.mulf %349, %258 : vector<8x128xf32>
      %352 = arith.mulf %349, %266 : vector<8x128xf32>
      %353 = arith.mulf %314, %314 : vector<8x128xf32>
      %354 = arith.mulf %322, %322 : vector<8x128xf32>
      %355 = arith.addf %353, %354 : vector<8x128xf32>
      %356 = arith.mulf %330, %330 : vector<8x128xf32>
      %357 = arith.addf %355, %356 : vector<8x128xf32>
      %358 = math.rsqrt %357 : vector<8x128xf32>
      %cst_83 = arith.constant 0.000000e+00 : f32
      %359 = vector.broadcast %cst_83 : f32 to vector<8x128xf32>
      %360 = arith.subf %359, %358 : vector<8x128xf32>
      %361 = arith.mulf %360, %314 : vector<8x128xf32>
      %362 = arith.mulf %360, %322 : vector<8x128xf32>
      %363 = arith.mulf %360, %330 : vector<8x128xf32>
      %364 = arith.mulf %340, %112 : vector<8x128xf32>
      %365 = arith.mulf %341, %109 : vector<8x128xf32>
      %366 = arith.subf %364, %365 : vector<8x128xf32>
      %367 = arith.mulf %341, %106 : vector<8x128xf32>
      %368 = arith.mulf %339, %112 : vector<8x128xf32>
      %369 = arith.subf %367, %368 : vector<8x128xf32>
      %370 = arith.mulf %339, %109 : vector<8x128xf32>
      %371 = arith.mulf %340, %106 : vector<8x128xf32>
      %372 = arith.subf %370, %371 : vector<8x128xf32>
      %373 = arith.mulf %351, %112 : vector<8x128xf32>
      %374 = arith.mulf %352, %109 : vector<8x128xf32>
      %375 = arith.subf %373, %374 : vector<8x128xf32>
      %376 = arith.mulf %352, %106 : vector<8x128xf32>
      %377 = arith.mulf %350, %112 : vector<8x128xf32>
      %378 = arith.subf %376, %377 : vector<8x128xf32>
      %379 = arith.mulf %350, %109 : vector<8x128xf32>
      %380 = arith.mulf %351, %106 : vector<8x128xf32>
      %381 = arith.subf %379, %380 : vector<8x128xf32>
      %382 = arith.mulf %340, %121 : vector<8x128xf32>
      %383 = arith.mulf %341, %118 : vector<8x128xf32>
      %384 = arith.subf %382, %383 : vector<8x128xf32>
      %385 = arith.mulf %341, %115 : vector<8x128xf32>
      %386 = arith.mulf %339, %121 : vector<8x128xf32>
      %387 = arith.subf %385, %386 : vector<8x128xf32>
      %388 = arith.mulf %339, %118 : vector<8x128xf32>
      %389 = arith.mulf %340, %115 : vector<8x128xf32>
      %390 = arith.subf %388, %389 : vector<8x128xf32>
      %391 = arith.addf %375, %384 : vector<8x128xf32>
      %392 = arith.addf %378, %387 : vector<8x128xf32>
      %393 = arith.addf %381, %390 : vector<8x128xf32>
      %394 = arith.mulf %362, %112 : vector<8x128xf32>
      %395 = arith.mulf %363, %109 : vector<8x128xf32>
      %396 = arith.subf %394, %395 : vector<8x128xf32>
      %397 = arith.mulf %363, %106 : vector<8x128xf32>
      %398 = arith.mulf %361, %112 : vector<8x128xf32>
      %399 = arith.subf %397, %398 : vector<8x128xf32>
      %400 = arith.mulf %361, %109 : vector<8x128xf32>
      %401 = arith.mulf %362, %106 : vector<8x128xf32>
      %402 = arith.subf %400, %401 : vector<8x128xf32>
      %403 = arith.mulf %351, %121 : vector<8x128xf32>
      %404 = arith.mulf %352, %118 : vector<8x128xf32>
      %405 = arith.subf %403, %404 : vector<8x128xf32>
      %406 = arith.mulf %352, %115 : vector<8x128xf32>
      %407 = arith.mulf %350, %121 : vector<8x128xf32>
      %408 = arith.subf %406, %407 : vector<8x128xf32>
      %409 = arith.mulf %350, %118 : vector<8x128xf32>
      %410 = arith.mulf %351, %115 : vector<8x128xf32>
      %411 = arith.subf %409, %410 : vector<8x128xf32>
      %cst_84 = arith.constant 2.000000e+00 : f32
      %412 = vector.broadcast %cst_84 : f32 to vector<8x128xf32>
      %413 = arith.mulf %412, %405 : vector<8x128xf32>
      %cst_85 = arith.constant 2.000000e+00 : f32
      %414 = vector.broadcast %cst_85 : f32 to vector<8x128xf32>
      %415 = arith.mulf %414, %408 : vector<8x128xf32>
      %cst_86 = arith.constant 2.000000e+00 : f32
      %416 = vector.broadcast %cst_86 : f32 to vector<8x128xf32>
      %417 = arith.mulf %416, %411 : vector<8x128xf32>
      %418 = arith.addf %396, %413 : vector<8x128xf32>
      %419 = arith.addf %399, %415 : vector<8x128xf32>
      %420 = arith.addf %402, %417 : vector<8x128xf32>
      %421 = arith.mulf %340, %130 : vector<8x128xf32>
      %422 = arith.mulf %341, %127 : vector<8x128xf32>
      %423 = arith.subf %421, %422 : vector<8x128xf32>
      %424 = arith.mulf %341, %124 : vector<8x128xf32>
      %425 = arith.mulf %339, %130 : vector<8x128xf32>
      %426 = arith.subf %424, %425 : vector<8x128xf32>
      %427 = arith.mulf %339, %127 : vector<8x128xf32>
      %428 = arith.mulf %340, %124 : vector<8x128xf32>
      %429 = arith.subf %427, %428 : vector<8x128xf32>
      %430 = arith.addf %418, %423 : vector<8x128xf32>
      %431 = arith.addf %419, %426 : vector<8x128xf32>
      %432 = arith.addf %420, %429 : vector<8x128xf32>
      %433 = arith.mulf %391, %391 : vector<8x128xf32>
      %434 = arith.mulf %392, %392 : vector<8x128xf32>
      %435 = arith.addf %433, %434 : vector<8x128xf32>
      %436 = arith.mulf %393, %393 : vector<8x128xf32>
      %437 = arith.addf %435, %436 : vector<8x128xf32>
      %438 = math.rsqrt %437 : vector<8x128xf32>
      %439 = arith.mulf %430, %430 : vector<8x128xf32>
      %440 = arith.mulf %431, %431 : vector<8x128xf32>
      %441 = arith.addf %439, %440 : vector<8x128xf32>
      %442 = arith.mulf %432, %432 : vector<8x128xf32>
      %443 = arith.addf %441, %442 : vector<8x128xf32>
      %444 = math.rsqrt %443 : vector<8x128xf32>
      %445 = arith.mulf %366, %366 : vector<8x128xf32>
      %446 = arith.mulf %369, %369 : vector<8x128xf32>
      %447 = arith.addf %445, %446 : vector<8x128xf32>
      %448 = arith.mulf %372, %372 : vector<8x128xf32>
      %449 = arith.addf %447, %448 : vector<8x128xf32>
      %450 = math.rsqrt %449 : vector<8x128xf32>
      %451 = arith.mulf %450, %366 : vector<8x128xf32>
      %452 = arith.mulf %450, %369 : vector<8x128xf32>
      %453 = arith.mulf %450, %372 : vector<8x128xf32>
      %454 = arith.mulf %438, %451 : vector<8x128xf32>
      %455 = arith.mulf %438, %452 : vector<8x128xf32>
      %456 = arith.mulf %438, %453 : vector<8x128xf32>
      %457 = arith.mulf %444, %451 : vector<8x128xf32>
      %458 = arith.mulf %444, %452 : vector<8x128xf32>
      %459 = arith.mulf %444, %453 : vector<8x128xf32>
      %460 = arith.mulf %452, %341 : vector<8x128xf32>
      %461 = arith.mulf %453, %340 : vector<8x128xf32>
      %462 = arith.subf %460, %461 : vector<8x128xf32>
      %463 = arith.mulf %453, %339 : vector<8x128xf32>
      %464 = arith.mulf %451, %341 : vector<8x128xf32>
      %465 = arith.subf %463, %464 : vector<8x128xf32>
      %466 = arith.mulf %451, %340 : vector<8x128xf32>
      %467 = arith.mulf %452, %339 : vector<8x128xf32>
      %468 = arith.subf %466, %467 : vector<8x128xf32>
      %469 = arith.mulf %451, %451 : vector<8x128xf32>
      %470 = arith.mulf %452, %452 : vector<8x128xf32>
      %471 = arith.addf %469, %470 : vector<8x128xf32>
      %472 = arith.mulf %453, %453 : vector<8x128xf32>
      %473 = arith.addf %471, %472 : vector<8x128xf32>
      %474 = math.rsqrt %473 : vector<8x128xf32>
      %475 = arith.mulf %474, %451 : vector<8x128xf32>
      %476 = arith.mulf %474, %452 : vector<8x128xf32>
      %477 = arith.mulf %474, %453 : vector<8x128xf32>
      %478 = arith.mulf %475, %350 : vector<8x128xf32>
      %479 = arith.mulf %476, %351 : vector<8x128xf32>
      %480 = arith.addf %478, %479 : vector<8x128xf32>
      %481 = arith.mulf %477, %352 : vector<8x128xf32>
      %482 = arith.addf %480, %481 : vector<8x128xf32>
      %cst_87 = arith.constant 0.000000e+00 : f32
      %483 = vector.broadcast %cst_87 : f32 to vector<8x128xf32>
      %484 = arith.subf %483, %482 : vector<8x128xf32>
      %485 = arith.mulf %462, %350 : vector<8x128xf32>
      %486 = arith.mulf %465, %351 : vector<8x128xf32>
      %487 = arith.addf %485, %486 : vector<8x128xf32>
      %488 = arith.mulf %468, %352 : vector<8x128xf32>
      %489 = arith.addf %487, %488 : vector<8x128xf32>
      %490 = arith.mulf %462, %454 : vector<8x128xf32>
      %491 = arith.mulf %465, %455 : vector<8x128xf32>
      %492 = arith.addf %490, %491 : vector<8x128xf32>
      %493 = arith.mulf %468, %456 : vector<8x128xf32>
      %494 = arith.addf %492, %493 : vector<8x128xf32>
      %cst_88 = arith.constant 0.000000e+00 : f32
      %495 = vector.broadcast %cst_88 : f32 to vector<8x128xf32>
      %496 = arith.subf %495, %494 : vector<8x128xf32>
      %497 = arith.mulf %475, %361 : vector<8x128xf32>
      %498 = arith.mulf %476, %362 : vector<8x128xf32>
      %499 = arith.addf %497, %498 : vector<8x128xf32>
      %500 = arith.mulf %477, %363 : vector<8x128xf32>
      %501 = arith.addf %499, %500 : vector<8x128xf32>
      %502 = arith.mulf %489, %496 : vector<8x128xf32>
      %503 = arith.subf %501, %502 : vector<8x128xf32>
      %cst_89 = arith.constant 0.000000e+00 : f32
      %504 = vector.broadcast %cst_89 : f32 to vector<8x128xf32>
      %505 = arith.subf %504, %503 : vector<8x128xf32>
      %506 = arith.mulf %462, %361 : vector<8x128xf32>
      %507 = arith.mulf %465, %362 : vector<8x128xf32>
      %508 = arith.addf %506, %507 : vector<8x128xf32>
      %509 = arith.mulf %468, %363 : vector<8x128xf32>
      %510 = arith.addf %508, %509 : vector<8x128xf32>
      %511 = arith.mulf %484, %496 : vector<8x128xf32>
      %512 = arith.subf %510, %511 : vector<8x128xf32>
      %513 = arith.mulf %462, %457 : vector<8x128xf32>
      %514 = arith.mulf %465, %458 : vector<8x128xf32>
      %515 = arith.addf %513, %514 : vector<8x128xf32>
      %516 = arith.mulf %468, %459 : vector<8x128xf32>
      %517 = arith.addf %515, %516 : vector<8x128xf32>
      %518 = arith.mulf %484, %489 : vector<8x128xf32>
      %519 = arith.subf %517, %518 : vector<8x128xf32>
      %cst_90 = arith.constant 0.000000e+00 : f32
      %520 = vector.broadcast %cst_90 : f32 to vector<8x128xf32>
      %521 = arith.subf %520, %519 : vector<8x128xf32>
      %522 = arith.mulf %475, %159 : vector<8x128xf32>
      %523 = arith.mulf %476, %176 : vector<8x128xf32>
      %524 = arith.addf %522, %523 : vector<8x128xf32>
      %525 = arith.mulf %477, %193 : vector<8x128xf32>
      %526 = arith.addf %524, %525 : vector<8x128xf32>
      %527 = arith.mulf %339, %154 : vector<8x128xf32>
      %528 = arith.mulf %340, %171 : vector<8x128xf32>
      %529 = arith.addf %527, %528 : vector<8x128xf32>
      %530 = arith.mulf %341, %186 : vector<8x128xf32>
      %531 = arith.addf %529, %530 : vector<8x128xf32>
      %532 = arith.subf %526, %531 : vector<8x128xf32>
      %533 = arith.mulf %339, %149 : vector<8x128xf32>
      %534 = arith.mulf %340, %164 : vector<8x128xf32>
      %535 = arith.addf %533, %534 : vector<8x128xf32>
      %536 = arith.mulf %341, %181 : vector<8x128xf32>
      %537 = arith.addf %535, %536 : vector<8x128xf32>
      %538 = arith.mulf %462, %159 : vector<8x128xf32>
      %539 = arith.mulf %465, %176 : vector<8x128xf32>
      %540 = arith.addf %538, %539 : vector<8x128xf32>
      %541 = arith.mulf %468, %193 : vector<8x128xf32>
      %542 = arith.addf %540, %541 : vector<8x128xf32>
      %543 = arith.subf %537, %542 : vector<8x128xf32>
      %544 = arith.mulf %462, %154 : vector<8x128xf32>
      %545 = arith.mulf %465, %171 : vector<8x128xf32>
      %546 = arith.addf %544, %545 : vector<8x128xf32>
      %547 = arith.mulf %468, %186 : vector<8x128xf32>
      %548 = arith.addf %546, %547 : vector<8x128xf32>
      %549 = arith.mulf %475, %149 : vector<8x128xf32>
      %550 = arith.mulf %476, %164 : vector<8x128xf32>
      %551 = arith.addf %549, %550 : vector<8x128xf32>
      %552 = arith.mulf %477, %181 : vector<8x128xf32>
      %553 = arith.addf %551, %552 : vector<8x128xf32>
      %554 = arith.subf %548, %553 : vector<8x128xf32>
      %555 = arith.mulf %484, %462 : vector<8x128xf32>
      %556 = arith.mulf %484, %465 : vector<8x128xf32>
      %557 = arith.mulf %484, %468 : vector<8x128xf32>
      %558 = arith.mulf %489, %475 : vector<8x128xf32>
      %559 = arith.mulf %489, %476 : vector<8x128xf32>
      %560 = arith.mulf %489, %477 : vector<8x128xf32>
      %561 = arith.addf %555, %558 : vector<8x128xf32>
      %562 = arith.addf %556, %559 : vector<8x128xf32>
      %563 = arith.addf %557, %560 : vector<8x128xf32>
      %564 = arith.mulf %496, %339 : vector<8x128xf32>
      %565 = arith.mulf %496, %340 : vector<8x128xf32>
      %566 = arith.mulf %496, %341 : vector<8x128xf32>
      %567 = arith.addf %561, %564 : vector<8x128xf32>
      %568 = arith.addf %562, %565 : vector<8x128xf32>
      %569 = arith.addf %563, %566 : vector<8x128xf32>
      %570 = arith.mulf %149, %567 : vector<8x128xf32>
      %571 = arith.mulf %164, %568 : vector<8x128xf32>
      %572 = arith.addf %570, %571 : vector<8x128xf32>
      %573 = arith.mulf %181, %569 : vector<8x128xf32>
      %574 = arith.addf %572, %573 : vector<8x128xf32>
      %575 = arith.mulf %154, %567 : vector<8x128xf32>
      %576 = arith.mulf %171, %568 : vector<8x128xf32>
      %577 = arith.addf %575, %576 : vector<8x128xf32>
      %578 = arith.mulf %186, %569 : vector<8x128xf32>
      %579 = arith.addf %577, %578 : vector<8x128xf32>
      %580 = arith.mulf %159, %567 : vector<8x128xf32>
      %581 = arith.mulf %176, %568 : vector<8x128xf32>
      %582 = arith.addf %580, %581 : vector<8x128xf32>
      %583 = arith.mulf %193, %569 : vector<8x128xf32>
      %584 = arith.addf %582, %583 : vector<8x128xf32>
      %585 = arith.mulf %505, %462 : vector<8x128xf32>
      %586 = arith.mulf %505, %465 : vector<8x128xf32>
      %587 = arith.mulf %505, %468 : vector<8x128xf32>
      %588 = arith.mulf %512, %475 : vector<8x128xf32>
      %589 = arith.mulf %512, %476 : vector<8x128xf32>
      %590 = arith.mulf %512, %477 : vector<8x128xf32>
      %591 = arith.addf %585, %588 : vector<8x128xf32>
      %592 = arith.addf %586, %589 : vector<8x128xf32>
      %593 = arith.addf %587, %590 : vector<8x128xf32>
      %594 = arith.mulf %521, %339 : vector<8x128xf32>
      %595 = arith.mulf %521, %340 : vector<8x128xf32>
      %596 = arith.mulf %521, %341 : vector<8x128xf32>
      %597 = arith.addf %591, %594 : vector<8x128xf32>
      %598 = arith.addf %592, %595 : vector<8x128xf32>
      %599 = arith.addf %593, %596 : vector<8x128xf32>
      %600 = arith.mulf %149, %597 : vector<8x128xf32>
      %601 = arith.mulf %164, %598 : vector<8x128xf32>
      %602 = arith.addf %600, %601 : vector<8x128xf32>
      %603 = arith.mulf %181, %599 : vector<8x128xf32>
      %604 = arith.addf %602, %603 : vector<8x128xf32>
      %605 = arith.mulf %154, %597 : vector<8x128xf32>
      %606 = arith.mulf %171, %598 : vector<8x128xf32>
      %607 = arith.addf %605, %606 : vector<8x128xf32>
      %608 = arith.mulf %186, %599 : vector<8x128xf32>
      %609 = arith.addf %607, %608 : vector<8x128xf32>
      %610 = arith.mulf %159, %597 : vector<8x128xf32>
      %611 = arith.mulf %176, %598 : vector<8x128xf32>
      %612 = arith.addf %610, %611 : vector<8x128xf32>
      %613 = arith.mulf %193, %599 : vector<8x128xf32>
      %614 = arith.addf %612, %613 : vector<8x128xf32>
      %615 = arith.subf %52, %574 : vector<8x128xf32>
      %616 = arith.subf %55, %579 : vector<8x128xf32>
      %617 = arith.subf %58, %584 : vector<8x128xf32>
      %618 = vector.broadcast %8 : f32 to vector<8x128xf32>
      %619 = arith.mulf %618, %52 : vector<8x128xf32>
      %620 = vector.broadcast %9 : f32 to vector<8x128xf32>
      %621 = arith.mulf %620, %55 : vector<8x128xf32>
      %622 = arith.addf %619, %621 : vector<8x128xf32>
      %623 = vector.broadcast %10 : f32 to vector<8x128xf32>
      %624 = arith.mulf %623, %58 : vector<8x128xf32>
      %625 = arith.addf %622, %624 : vector<8x128xf32>
      %626 = vector.broadcast %11 : f32 to vector<8x128xf32>
      %627 = arith.mulf %626, %52 : vector<8x128xf32>
      %628 = vector.broadcast %12 : f32 to vector<8x128xf32>
      %629 = arith.mulf %628, %55 : vector<8x128xf32>
      %630 = arith.addf %627, %629 : vector<8x128xf32>
      %631 = vector.broadcast %13 : f32 to vector<8x128xf32>
      %632 = arith.mulf %631, %58 : vector<8x128xf32>
      %633 = arith.addf %630, %632 : vector<8x128xf32>
      %634 = vector.broadcast %14 : f32 to vector<8x128xf32>
      %635 = arith.mulf %634, %52 : vector<8x128xf32>
      %636 = vector.broadcast %15 : f32 to vector<8x128xf32>
      %637 = arith.mulf %636, %55 : vector<8x128xf32>
      %638 = arith.addf %635, %637 : vector<8x128xf32>
      %639 = vector.broadcast %16 : f32 to vector<8x128xf32>
      %640 = arith.mulf %639, %58 : vector<8x128xf32>
      %641 = arith.addf %638, %640 : vector<8x128xf32>
      %642 = arith.mulf %55, %641 : vector<8x128xf32>
      %643 = arith.mulf %58, %633 : vector<8x128xf32>
      %644 = arith.subf %642, %643 : vector<8x128xf32>
      %645 = arith.mulf %58, %625 : vector<8x128xf32>
      %646 = arith.mulf %52, %641 : vector<8x128xf32>
      %647 = arith.subf %645, %646 : vector<8x128xf32>
      %648 = arith.mulf %52, %633 : vector<8x128xf32>
      %649 = arith.mulf %55, %625 : vector<8x128xf32>
      %650 = arith.subf %648, %649 : vector<8x128xf32>
      %651 = arith.subf %574, %604 : vector<8x128xf32>
      %652 = arith.subf %579, %609 : vector<8x128xf32>
      %653 = arith.subf %584, %614 : vector<8x128xf32>
      %654 = arith.mulf %55, %653 : vector<8x128xf32>
      %655 = arith.mulf %58, %652 : vector<8x128xf32>
      %656 = arith.subf %654, %655 : vector<8x128xf32>
      %657 = arith.mulf %58, %651 : vector<8x128xf32>
      %658 = arith.mulf %52, %653 : vector<8x128xf32>
      %659 = arith.subf %657, %658 : vector<8x128xf32>
      %660 = arith.mulf %52, %652 : vector<8x128xf32>
      %661 = arith.mulf %55, %651 : vector<8x128xf32>
      %662 = arith.subf %660, %661 : vector<8x128xf32>
      %663 = vector.broadcast %8 : f32 to vector<8x128xf32>
      %664 = arith.mulf %663, %656 : vector<8x128xf32>
      %665 = vector.broadcast %9 : f32 to vector<8x128xf32>
      %666 = arith.mulf %665, %659 : vector<8x128xf32>
      %667 = arith.addf %664, %666 : vector<8x128xf32>
      %668 = vector.broadcast %10 : f32 to vector<8x128xf32>
      %669 = arith.mulf %668, %662 : vector<8x128xf32>
      %670 = arith.addf %667, %669 : vector<8x128xf32>
      %671 = vector.broadcast %11 : f32 to vector<8x128xf32>
      %672 = arith.mulf %671, %656 : vector<8x128xf32>
      %673 = vector.broadcast %12 : f32 to vector<8x128xf32>
      %674 = arith.mulf %673, %659 : vector<8x128xf32>
      %675 = arith.addf %672, %674 : vector<8x128xf32>
      %676 = vector.broadcast %13 : f32 to vector<8x128xf32>
      %677 = arith.mulf %676, %662 : vector<8x128xf32>
      %678 = arith.addf %675, %677 : vector<8x128xf32>
      %679 = vector.broadcast %14 : f32 to vector<8x128xf32>
      %680 = arith.mulf %679, %656 : vector<8x128xf32>
      %681 = vector.broadcast %15 : f32 to vector<8x128xf32>
      %682 = arith.mulf %681, %659 : vector<8x128xf32>
      %683 = arith.addf %680, %682 : vector<8x128xf32>
      %684 = vector.broadcast %16 : f32 to vector<8x128xf32>
      %685 = arith.mulf %684, %662 : vector<8x128xf32>
      %686 = arith.addf %683, %685 : vector<8x128xf32>
      %cst_91 = arith.constant 0.000000e+00 : f32
      %687 = vector.broadcast %cst_91 : f32 to vector<8x128xf32>
      %688 = arith.maximumf %232, %687 : vector<8x128xf32>
      %c0_92 = arith.constant 0 : index
      %689 = arith.index_cast %19 : i32 to index
      %c0_93 = arith.constant 0 : index
      %690 = vector.load %arg4[%c0_92, %689, %c0_93] : memref<4x32x128xf32, #tpu.memory_space<vmem>>, vector<1x8x128xf32>
      %691 = vector.shape_cast %690 : vector<1x8x128xf32> to vector<8x128xf32>
      %692 = vector.shape_cast %688 : vector<8x128xf32> to vector<1x8x128xf32>
      tpu.vector_store %arg4[%c0_92, %689, %c0_93], %692 {strides = array<i32>} : memref<4x32x128xf32, #tpu.memory_space<vmem>>, vector<1x8x128xf32>,
      %693 = vector.broadcast %2 : f32 to vector<8x128xf32>
      %694 = arith.mulf %693, %532 : vector<8x128xf32>
      %695 = vector.broadcast %3 : f32 to vector<8x128xf32>
      %696 = arith.mulf %695, %615 : vector<8x128xf32>
      %697 = arith.addf %694, %696 : vector<8x128xf32>
      %698 = arith.addf %697, %644 : vector<8x128xf32>
      %699 = arith.subf %698, %670 : vector<8x128xf32>
      %c1_94 = arith.constant 1 : index
      %700 = arith.index_cast %19 : i32 to index
      %c0_95 = arith.constant 0 : index
      %701 = vector.load %arg4[%c1_94, %700, %c0_95] : memref<4x32x128xf32, #tpu.memory_space<vmem>>, vector<1x8x128xf32>
      %702 = vector.shape_cast %701 : vector<1x8x128xf32> to vector<8x128xf32>
      %703 = vector.shape_cast %699 : vector<8x128xf32> to vector<1x8x128xf32>
      tpu.vector_store %arg4[%c1_94, %700, %c0_95], %703 {strides = array<i32>} : memref<4x32x128xf32, #tpu.memory_space<vmem>>, vector<1x8x128xf32>,
      %704 = vector.broadcast %2 : f32 to vector<8x128xf32>
      %705 = arith.mulf %704, %543 : vector<8x128xf32>
      %706 = vector.broadcast %3 : f32 to vector<8x128xf32>
      %707 = arith.mulf %706, %616 : vector<8x128xf32>
      %708 = arith.addf %705, %707 : vector<8x128xf32>
      %709 = arith.addf %708, %647 : vector<8x128xf32>
      %710 = arith.subf %709, %678 : vector<8x128xf32>
      %c2_96 = arith.constant 2 : index
      %711 = arith.index_cast %19 : i32 to index
      %c0_97 = arith.constant 0 : index
      %712 = vector.load %arg4[%c2_96, %711, %c0_97] : memref<4x32x128xf32, #tpu.memory_space<vmem>>, vector<1x8x128xf32>
      %713 = vector.shape_cast %712 : vector<1x8x128xf32> to vector<8x128xf32>
      %714 = vector.shape_cast %710 : vector<8x128xf32> to vector<1x8x128xf32>
      tpu.vector_store %arg4[%c2_96, %711, %c0_97], %714 {strides = array<i32>} : memref<4x32x128xf32, #tpu.memory_space<vmem>>, vector<1x8x128xf32>,
      %715 = vector.broadcast %2 : f32 to vector<8x128xf32>
      %716 = arith.mulf %715, %554 : vector<8x128xf32>
      %717 = vector.broadcast %3 : f32 to vector<8x128xf32>
      %718 = arith.mulf %717, %617 : vector<8x128xf32>
      %719 = arith.addf %716, %718 : vector<8x128xf32>
      %720 = arith.addf %719, %650 : vector<8x128xf32>
      %721 = arith.subf %720, %686 : vector<8x128xf32>
      %c3_98 = arith.constant 3 : index
      %722 = arith.index_cast %19 : i32 to index
      %c0_99 = arith.constant 0 : index
      %723 = vector.load %arg4[%c3_98, %722, %c0_99] : memref<4x32x128xf32, #tpu.memory_space<vmem>>, vector<1x8x128xf32>
      %724 = vector.shape_cast %723 : vector<1x8x128xf32> to vector<8x128xf32>
      %725 = vector.shape_cast %721 : vector<8x128xf32> to vector<1x8x128xf32>
      tpu.vector_store %arg4[%c3_98, %722, %c0_99], %725 {strides = array<i32>} : memref<4x32x128xf32, #tpu.memory_space<vmem>>, vector<1x8x128xf32>,
    }
    %c4_i32_0 = arith.constant 4 : i32
    return
  }
  func.func @transform_0(%arg0: i32) -> (i32, i32, i32) {
    %c0_i32 = arith.constant 0 : i32
    %c0_i32_0 = arith.constant 0 : i32
    %c0_i32_1 = arith.constant 0 : i32
    return %c0_i32, %arg0, %c0_i32_0 : i32, i32, i32
  }
  func.func @transform_1(%arg0: i32) -> (i32, i32, i32) {
    %c0_i32 = arith.constant 0 : i32
    %c0_i32_0 = arith.constant 0 : i32
    %c0_i32_1 = arith.constant 0 : i32
    return %c0_i32, %arg0, %c0_i32_0 : i32, i32, i32
  }
  func.func @transform_2(%arg0: i32) -> i32 {
    %c0_i32 = arith.constant 0 : i32
    %c0_i32_0 = arith.constant 0 : i32
    return %c0_i32 : i32
  }
  func.func @transform_3(%arg0: i32) -> (i32, i32, i32) {
    %c0_i32 = arith.constant 0 : i32
    %c0_i32_0 = arith.constant 0 : i32
    %c0_i32_1 = arith.constant 0 : i32
    return %c0_i32, %arg0, %c0_i32_0 : i32, i32, i32
  }
}

</mosaic_0001>

<llo_original>
// kernel: tpu_custom_call.1
$region0: #{tpu_custom_call.1}
  #allocation0 [shape = 'u32[]', space=smem, size = 0x4, offset = 0x4, fixed_abs, tag = 'smem constant byte address 0x4 - core index']
  #allocation1 [shape = 'u32[72,128]{1,0:T(1,128)}', space=vmem, size = 0x9000, scoped, tag = 'internal scratch']
  #allocation10 [shape = 's32[]', space=sflag, size = 0x4, offset = 0, fixed_abs, tag = 'sflag constant byte address 0x0 - dummy sync flag']
  #allocation12 [shape = 's32[]', space=sflag, size = 0x4, offset = 0, fixed_abs, tag = 'sflag constant byte address 0x0 - dummy sync flag']
  #allocation14 [shape = 's32[]', space=sflag, size = 0x4, offset = 0, fixed_abs, tag = 'sflag constant byte address 0x0 - dummy sync flag']
  %s0 = inlined_call_operand.hbm [shape: f32[13,64,128], index: 0, kind: input, shape index: {}]
  %s1 = inlined_call_operand.hbm [shape: f32[24,64,128], index: 1, kind: input, shape index: {}]
  %s2 = inlined_call_operand.vmem [shape: f32[17], index: 2, kind: input, shape index: {}]
  %s3 = inlined_call_operand.hbm [shape: f32[4,64,128], index: 3, kind: output, shape index: {}]
  %s4 = sld [smem:[#allocation0]]
  $region64: #{tpu_custom_call.1} parent=0
    _
  %s6 = ssub.s32 1, %s4
  %s7 = scalar_select 0, %s6, %s4
  $region1: #{tpu_custom_call.1} parent=0
    #allocation2 [shape = 'u8[425984]{0}', space=vmem, size = 0x68000, scoped, tag = 'input window, operand 0']
    #allocation3 [shape = 's32[2]{0}', space=sflag, size = 0x8, scoped, tag = 'scoped memory for tpu_custom_call.1']
    #allocation4 [shape = 's32[2]{0}', space=sflag, size = 0x8, scoped, tag = 'scoped memory for tpu_custom_call.1']
    #allocation5 [shape = 's32[2]{0}', space=sflag, size = 0x8, scoped, tag = 'scoped memory for tpu_custom_call.1']
    #allocation6 [shape = 'u8[786432]{0}', space=vmem, size = 0xc0000, scoped, tag = 'input window, operand 1']
    #allocation7 [shape = 's32[2]{0}', space=sflag, size = 0x8, scoped, tag = 'scoped memory for tpu_custom_call.1']
    #allocation8 [shape = 'u8[512]{0}', space=smem, size = 0x200, scoped, tag = 'input window, operand 2, single buffered']
    #allocation9 [shape = 'u8[131072]{0}', space=vmem, size = 0x20000, scoped, tag = 'output window, operand 0']
    %8 = vsyncpa [#allocation3], 0
    %s9 = scalar_lea.sflag [#allocation3], 1
    %10 = vsyncpa %s9, 0
    %11 = vsyncpa [#allocation7], 0
    %s12 = scalar_lea.sflag [#allocation7], 1
    %13 = vsyncpa %s12, 0
    %14 = vsyncpa [#allocation5], 0
    %15 = vsyncpa [#allocation4], 0
    %s16 = scalar_lea.sflag [#allocation4], 1
    %17 = vsyncpa %s16, 0
    loop: start=0, step=1, limit=4
    $region2: #{tpu_custom_call.1} parent=1 // loop_pre_header
      _
    $region3: #{tpu_custom_call.1} parent=1 // loop_header
      %s19 = sphi 0, %s23
      %p20 = scmp.ge.s32.totalorder %s19, 4
      %s29 = sphi 0, %s31
      %s32 = sphi 0, %s29
      %s33 = sphi 0, %s32
      %s49 = sphi 0, %s33
      %s55 = sphi 0, %s57
      %s58 = sphi 0, %s55
      %s59 = sphi 0, %s58
      %s75 = sphi 0, %s59
      %s79 = sphi 0, %s79
      %s81 = sphi 0, %s79
      %s82 = sphi 0, %s81
      %s96 = sphi 0, %s82
      %s102 = sphi 0, %s104
      %s105 = sphi 0, %s102
      %s106 = sphi 0, %s105
      %s122 = sphi 0, %s106
    $region4: #{tpu_custom_call.1} parent=1 // loop_header_branch
      %22 = sbr.rel (%p20) target = $region8
    $region5: #{tpu_custom_call.1} parent=1 // loop_body
      %s24 = ssub.s32 %s19, 1
      %s25 = ssub.s32 %s19, 2
      %s26 = sadd.s32 %s19, 1
      %s27 = ssub.s32 %s19, %s26
      %p28 = scmp.eq.s32.totalorder %s27, 0
      %s30 = sadd.s32 %s29, 1
      %s31 = scalar_select %p28, %s29, %s30
      %p34 = pneg %p28
      %p35 = scmp.eq.s32.totalorder %s19, 1
      %p36 = por %p34, %p35
      %p37 = scmp.ne.s32.totalorder %s29, %s32
      %p38 = scmp.eq.s32.totalorder %s19, 0
      %p39 = por %p37, %p38
      %p40 = scmp.ne.s32.totalorder %s29, %s32
      %p41 = scmp.eq.s32.totalorder %s24, 1
      %p42 = por %p40, %p41
      %p43 = scmp.ne.s32.totalorder %s32, %s33
      %p44 = scmp.eq.s32.totalorder %s24, 0
      %p45 = por %p43, %p44
      %p46 = scmp.ne.s32.totalorder %s32, %s33
      %p47 = scmp.eq.s32.totalorder %s25, 1
      %p48 = por %p46, %p47
      %p50 = scmp.ne.s32.totalorder %s33, %s49
      %p51 = scmp.eq.s32.totalorder %s25, 0
      %p52 = por %p50, %p51
      %s53 = ssub.s32 %s19, %s26
      %p54 = scmp.eq.s32.totalorder %s53, 0
      %s56 = sadd.s32 %s55, 1
      %s57 = scalar_select %p54, %s55, %s56
      %p60 = pneg %p54
      %p61 = scmp.eq.s32.totalorder %s19, 1
      %p62 = por %p60, %p61
      %p63 = scmp.ne.s32.totalorder %s55, %s58
      %p64 = scmp.eq.s32.totalorder %s19, 0
      %p65 = por %p63, %p64
      %p66 = scmp.ne.s32.totalorder %s55, %s58
      %p67 = scmp.eq.s32.totalorder %s24, 1
      %p68 = por %p66, %p67
      %p69 = scmp.ne.s32.totalorder %s58, %s59
      %p70 = scmp.eq.s32.totalorder %s24, 0
      %p71 = por %p69, %p70
      %p72 = scmp.ne.s32.totalorder %s58, %s59
      %p73 = scmp.eq.s32.totalorder %s25, 1
      %p74 = por %p72, %p73
      %p76 = scmp.ne.s32.totalorder %s59, %s75
      %p77 = scmp.eq.s32.totalorder %s25, 0
      %p78 = por %p76, %p77
      %s80 = sadd.s32 %s79, 1
      %p83 = scmp.eq.s32.totalorder %s19, 1
      %p84 = scmp.ne.s32.totalorder %s79, %s81
      %p85 = scmp.eq.s32.totalorder %s19, 0
      %p86 = por %p84, %p85
      %p87 = scmp.ne.s32.totalorder %s79, %s81
      %p88 = scmp.eq.s32.totalorder %s24, 1
      %p89 = por %p87, %p88
      %p90 = scmp.ne.s32.totalorder %s81, %s82
      %p91 = scmp.eq.s32.totalorder %s24, 0
      %p92 = por %p90, %p91
      %p93 = scmp.ne.s32.totalorder %s81, %s82
      %p94 = scmp.eq.s32.totalorder %s25, 1
      %p95 = por %p93, %p94
      %p97 = scmp.ne.s32.totalorder %s82, %s96
      %p98 = scmp.eq.s32.totalorder %s25, 0
      %p99 = por %p97, %p98
      %s100 = ssub.s32 %s19, %s26
      %p101 = scmp.eq.s32.totalorder %s100, 0
      %s103 = sadd.s32 %s102, 1
      %s104 = scalar_select %p101, %s102, %s103
      %p107 = pneg %p101
      %p108 = scmp.eq.s32.totalorder %s19, 1
      %p109 = por %p107, %p108
      %p110 = scmp.ne.s32.totalorder %s102, %s105
      %p111 = scmp.eq.s32.totalorder %s19, 0
      %p112 = por %p110, %p111
      %p113 = scmp.ne.s32.totalorder %s102, %s105
      %p114 = scmp.eq.s32.totalorder %s24, 1
      %p115 = por %p113, %p114
      %p116 = scmp.ne.s32.totalorder %s105, %s106
      %p117 = scmp.eq.s32.totalorder %s24, 0
      %p118 = por %p116, %p117
      %p119 = scmp.ne.s32.totalorder %s105, %s106
      %p120 = scmp.eq.s32.totalorder %s25, 1
      %p121 = por %p119, %p120
      %p123 = scmp.ne.s32.totalorder %s106, %s122
      %p124 = scmp.eq.s32.totalorder %s25, 0
      %p125 = por %p123, %p124
      %p126 = scmp.le.s32.totalorder 1, %s19
      %p127 = scmp.lt.s32.totalorder %s19, 3
      %p128 = pnand %p126, %p127
      %p129 = pneg %p128
      // Predicated region
      $region9: #{tpu_custom_call.1} parent=5 // pred_check
        _
      $region10: #{tpu_custom_call.1} parent=5 // pred_check_branch
        %131 = sbr.rel (%p128) target = $region12
      $region11: #{tpu_custom_call.1} parent=5 // pred_region
        %s132 = ssub.s32 %s19, 1
        // Predicated region
        $region13: #{tpu_custom_call.1} parent=11 // pred_check
          %p133 = pneg %p92
        $region14: #{tpu_custom_call.1} parent=11 // pred_check_branch
          %135 = sbr.rel (%p133) target = $region16
        $region15: #{tpu_custom_call.1} parent=11 // pred_region
          %137 = vsyncadd [#allocation5], 0
          %s139 = sshll.u32 %s2, 4
          %s140 = int_to_ptr.vmem [resolvable:$true] %s139
          %142 = dma.vmem_to_smem %s140, 16, [#allocation8], [#allocation5]
        $region16: #{tpu_custom_call.1} parent=11 // pred_fallthru
          _
      $region12: #{tpu_custom_call.1} parent=5 // pred_fallthru
        _
      %p143 = scmp.lt.s32.totalorder %s19, 2
      // Predicated region
      $region17: #{tpu_custom_call.1} parent=5 // pred_check
        %p144 = pneg %p143
      $region18: #{tpu_custom_call.1} parent=5 // pred_check_branch
        %146 = sbr.rel (%p144) target = $region20
      $region19: #{tpu_custom_call.1} parent=5 // pred_region
        // Predicated region
        $region21: #{tpu_custom_call.1} parent=19 // pred_check
          %p147 = pneg %p39
        $region22: #{tpu_custom_call.1} parent=19 // pred_check_branch
          %149 = sbr.rel (%p147) target = $region24
        $region23: #{tpu_custom_call.1} parent=19 // pred_region
          #allocation11 [shape = 'u32[6]{0}', space=smem, size = 0x18, scoped, tag = 'DMA stride descriptor']
          %s150 = sand.u32 %s29, 1
          %s151 = scalar_lea.sflag [#allocation3], %s150
          %s152 = sand.u32 %s29, 1
          %s153 = smul.addr %s152, 416
          %s154 = scalar_lea.vmem [#allocation2], %s153
          %s155 = smul.u32 4, %s19
          %157 = vsyncadd %s151, 0
          %s158 = smul.addr %s155, 8
          %s159 = scalar_lea.hbm %s0, %s158
          %s161 = sshll.u32 1, 14
          %s162 = sxor.u32 4294967295, %s161
          %s164 = sld [smem:[#allocation0]]
          %s165 = sadd.s32 2, %s164
          %s167 = sshll.u32 7, 26
          %s168 = sxor.u32 4294967295, %s167
          %s169 = sand.u32 0, %s168
          %s170 = sshll.u32 %s165, 26
          %s171 = sor.u32 %s169, %s170
          %s172 = sshll.u32 %s159, 4
          %s173 = int_to_ptr.hbm [resolvable:$true] %s172
          %s174 = sshll.u32 %s154, 4
          %s175 = int_to_ptr.vmem [resolvable:$true] %s174
          %181 = sst [smem:[#allocation11]] 1024
          %s182 = scalar_lea.smem [#allocation11], 1
          %183 = sst [smem:[%s182]] 512
          %s184 = scalar_lea.smem [#allocation11], 2
          %185 = sst [smem:[%s184]] 4
          %s186 = scalar_lea.smem [#allocation11], 3
          %187 = sst [smem:[%s186]] 128
          %s188 = scalar_lea.smem [#allocation11], 4
          %189 = sst [smem:[%s188]] 128
          %s190 = scalar_lea.smem [#allocation11], 5
          %191 = sst [smem:[%s190]] 8
          %193 = dma.general %s173, 6656, %s175, %s151, [#allocation10], [#allocation11], %s171, 0
        $region24: #{tpu_custom_call.1} parent=19 // pred_fallthru
          _
        // Predicated region
        $region25: #{tpu_custom_call.1} parent=19 // pred_check
          %p194 = pneg %p65
        $region26: #{tpu_custom_call.1} parent=19 // pred_check_branch
          %196 = sbr.rel (%p194) target = $region28
        $region27: #{tpu_custom_call.1} parent=19 // pred_region
          #allocation13 [shape = 'u32[6]{0}', space=smem, size = 0x18, scoped, tag = 'DMA stride descriptor']
          %s197 = sand.u32 %s55, 1
          %s198 = scalar_lea.sflag [#allocation7], %s197
          %s199 = sand.u32 %s55, 1
          %s200 = smul.addr %s199, 768
          %s201 = scalar_lea.vmem [#allocation6], %s200
          %s202 = smul.u32 4, %s19
          %204 = vsyncadd %s198, 0
          %s205 = smul.addr %s202, 8
          %s206 = scalar_lea.hbm %s1, %s205
          %s208 = sshll.u32 1, 14
          %s209 = sxor.u32 4294967295, %s208
          %s211 = sld [smem:[#allocation0]]
          %s212 = sadd.s32 2, %s211
          %s214 = sshll.u32 7, 26
          %s215 = sxor.u32 4294967295, %s214
          %s216 = sand.u32 0, %s215
          %s217 = sshll.u32 %s212, 26
          %s218 = sor.u32 %s216, %s217
          %s219 = sshll.u32 %s206, 4
          %s220 = int_to_ptr.hbm [resolvable:$true] %s219
          %s221 = sshll.u32 %s201, 4
          %s222 = int_to_ptr.vmem [resolvable:$true] %s221
          %228 = sst [smem:[#allocation13]] 1024
          %s229 = scalar_lea.smem [#allocation13], 1
          %230 = sst [smem:[%s229]] 512
          %s231 = scalar_lea.smem [#allocation13], 2
          %232 = sst [smem:[%s231]] 4
          %s233 = scalar_lea.smem [#allocation13], 3
          %234 = sst [smem:[%s233]] 128
          %s235 = scalar_lea.smem [#allocation13], 4
          %236 = sst [smem:[%s235]] 128
          %s237 = scalar_lea.smem [#allocation13], 5
          %238 = sst [smem:[%s237]] 8
          %240 = dma.general %s220, 12288, %s222, %s198, [#allocation12], [#allocation13], %s218, 0
        $region28: #{tpu_custom_call.1} parent=19 // pred_fallthru
          _
      $region20: #{tpu_custom_call.1} parent=5 // pred_fallthru
        _
      %p241 = scmp.le.s32.totalorder 1, %s19
      %p242 = scmp.lt.s32.totalorder %s19, 3
      %p243 = pnand %p241, %p242
      %p244 = pneg %p243
      // Predicated region
      $region29: #{tpu_custom_call.1} parent=5 // pred_check
        _
      $region30: #{tpu_custom_call.1} parent=5 // pred_check_branch
        %246 = sbr.rel (%p243) target = $region32
      $region31: #{tpu_custom_call.1} parent=5 // pred_region
        %s247 = ssub.s32 %s19, 1
        %s248 = sand.u32 %s32, 1
        %s249 = scalar_lea.sflag [#allocation3], %s248
        %s250 = sand.u32 %s32, 1
        %s251 = smul.addr %s250, 416
        %s252 = scalar_lea.vmem [#allocation2], %s251
        // Predicated region
        $region33: #{tpu_custom_call.1} parent=31 // pred_check
          %p253 = pneg %p45
        $region34: #{tpu_custom_call.1} parent=31 // pred_check_branch
          %255 = sbr.rel (%p253) target = $region36
        $region35: #{tpu_custom_call.1} parent=31 // pred_region
          %257 = dma.done %s249, 6656
        $region36: #{tpu_custom_call.1} parent=31 // pred_fallthru
          _
        %s258 = sand.u32 %s58, 1
        %s259 = scalar_lea.sflag [#allocation7], %s258
        %s260 = sand.u32 %s58, 1
        %s261 = smul.addr %s260, 768
        %s262 = scalar_lea.vmem [#allocation6], %s261
        // Predicated region
        $region37: #{tpu_custom_call.1} parent=31 // pred_check
          %p263 = pneg %p71
        $region38: #{tpu_custom_call.1} parent=31 // pred_check_branch
          %265 = sbr.rel (%p263) target = $region40
        $region39: #{tpu_custom_call.1} parent=31 // pred_region
          %267 = dma.done %s259, 12288
        $region40: #{tpu_custom_call.1} parent=31 // pred_fallthru
          _
        // Predicated region
        $region41: #{tpu_custom_call.1} parent=31 // pred_check
          %p268 = pneg %p92
        $region42: #{tpu_custom_call.1} parent=31 // pred_check_branch
          %270 = sbr.rel (%p268) target = $region44
        $region43: #{tpu_custom_call.1} parent=31 // pred_region
          %272 = dma.done [#allocation5], 16
        $region44: #{tpu_custom_call.1} parent=31 // pred_fallthru
          _
        %273 = sfence
        %s274 = sand.u32 %s32, 1
        %s275 = scalar_lea.sflag [#allocation3], %s274
        %s276 = sand.u32 %s32, 1
        %s277 = smul.addr %s276, 416
        %s278 = scalar_lea.vmem [#allocation2], %s277
        %p279 = pneg %p45
        %p280 = pneg %p42
        %s281 = sand.u32 %s58, 1
        %s282 = scalar_lea.sflag [#allocation7], %s281
        %s283 = sand.u32 %s58, 1
        %s284 = smul.addr %s283, 768
        %s285 = scalar_lea.vmem [#allocation6], %s284
        %p286 = pneg %p71
        %p287 = pneg %p68
        %p288 = pneg %p92
        %p289 = pneg %p89
        %p290 = pneg %p118
        %p291 = pneg %p115
        %s292 = sand.u32 %s105, 1
        %s293 = scalar_lea.sflag [#allocation4], %s292
        %s294 = sand.u32 %s105, 1
        %s295 = smul.addr %s294, 128
        %s296 = scalar_lea.vmem [#allocation9], %s295
        %s297 = smul.u32 4, %s24
        %s298 = smul.u32 4, %s24
        %s299 = smul.u32 4, %s24
        %s300 = sld [smem:[#allocation8]]
        %s301 = sld [smem:[#allocation8 + $0x1]]
        %s302 = sld [smem:[#allocation8 + $0x2]]
        %s303 = sld [smem:[#allocation8 + $0x3]]
        %s304 = sld [smem:[#allocation8 + $0x4]]
        %s305 = sld [smem:[#allocation8 + $0x5]]
        %s306 = sld [smem:[#allocation8 + $0x6]]
        %s307 = sld [smem:[#allocation8 + $0x7]]
        %s308 = sld [smem:[#allocation8 + $0x8]]
        %s309 = sld [smem:[#allocation8 + $0x9]]
        %s310 = sld [smem:[#allocation8 + $0xa]]
        %s311 = sld [smem:[#allocation8 + $0xb]]
        %s312 = sld [smem:[#allocation8 + $0xc]]
        %s313 = sld [smem:[#allocation8 + $0xd]]
        %s314 = sld [smem:[#allocation8 + $0xe]]
        %s315 = sld [smem:[#allocation8 + $0xf]]
        %s316 = sld [smem:[#allocation8 + $0x10]]
        loop: start=0, step=1, limit=4
        $region45: #{tpu_custom_call.1} parent=31 // loop_pre_header
          _
        $region46: #{tpu_custom_call.1} parent=31 // loop_header
          %s318 = sphi 0, %s322
          %p319 = scmp.ge.s32.totalorder %s318, 4
        $region47: #{tpu_custom_call.1} parent=31 // loop_header_branch
          %321 = sbr.rel (%p319) target = $region51
        $region48: #{tpu_custom_call.1} parent=31 // loop_body
          %s323 = smul.u32 %s318, 8
          %s324 = scalar_lea.vmem %s252, %s323 [#allocation2]
          %v325 = vld [vmem:[%s324] sm:$0xff]
          %s326 = sadd.s32 %s323, 32
          %s327 = scalar_lea.vmem %s252, %s326 [#allocation2]
          %v328 = vld [vmem:[%s327] sm:$0xff]
          %s329 = sadd.s32 %s323, 64
          %s330 = scalar_lea.vmem %s252, %s329 [#allocation2]
          %v331 = vld [vmem:[%s330] sm:$0xff]
          %s332 = sadd.s32 %s323, 96
          %s333 = scalar_lea.vmem %s252, %s332 [#allocation2]
          %v334 = vld [vmem:[%s333] sm:$0xff]
          %s335 = sadd.s32 %s323, 128
          %s336 = scalar_lea.vmem %s252, %s335 [#allocation2]
          %v337 = vld [vmem:[%s336] sm:$0xff]
          %s338 = sadd.s32 %s323, 160
          %s339 = scalar_lea.vmem %s252, %s338 [#allocation2]
          %v340 = vld [vmem:[%s339] sm:$0xff]
          %s341 = sadd.s32 %s323, 192
          %s342 = scalar_lea.vmem %s252, %s341 [#allocation2]
          %v343 = vld [vmem:[%s342] sm:$0xff]
          %s344 = sadd.s32 %s323, 224
          %s345 = scalar_lea.vmem %s252, %s344 [#allocation2]
          %v346 = vld [vmem:[%s345] sm:$0xff]
          %s347 = sadd.s32 %s323, 256
          %s348 = scalar_lea.vmem %s252, %s347 [#allocation2]
          %v349 = vld [vmem:[%s348] sm:$0xff]
          %s350 = sadd.s32 %s323, 288
          %s351 = scalar_lea.vmem %s252, %s350 [#allocation2]
          %v352 = vld [vmem:[%s351] sm:$0xff]
          %s353 = sadd.s32 %s323, 320
          %s354 = scalar_lea.vmem %s252, %s353 [#allocation2]
          %v355 = vld [vmem:[%s354] sm:$0xff]
          %s356 = sadd.s32 %s323, 352
          %s357 = scalar_lea.vmem %s252, %s356 [#allocation2]
          %v358 = vld [vmem:[%s357] sm:$0xff]
          %s359 = sadd.s32 %s323, 384
          %s360 = scalar_lea.vmem %s252, %s359 [#allocation2]
          %v361 = vld [vmem:[%s360] sm:$0xff]
          %s362 = scalar_lea.vmem %s262, %s323 [#allocation6]
          %v363 = vld [vmem:[%s362] sm:$0xff]
          %s364 = scalar_lea.vmem %s262, %s326 [#allocation6]
          %v365 = vld [vmem:[%s364] sm:$0xff]
          %s366 = scalar_lea.vmem %s262, %s329 [#allocation6]
          %v367 = vld [vmem:[%s366] sm:$0xff]
          %s368 = scalar_lea.vmem %s262, %s332 [#allocation6]
          %v369 = vld [vmem:[%s368] sm:$0xff]
          %s370 = scalar_lea.vmem %s262, %s335 [#allocation6]
          %v371 = vld [vmem:[%s370] sm:$0xff]
          %s372 = scalar_lea.vmem %s262, %s338 [#allocation6]
          %v373 = vld [vmem:[%s372] sm:$0xff]
          %s374 = scalar_lea.vmem %s262, %s341 [#allocation6]
          %v375 = vld [vmem:[%s374] sm:$0xff]
          %s376 = scalar_lea.vmem %s262, %s344 [#allocation6]
          %v377 = vld [vmem:[%s376] sm:$0xff]
          %s378 = scalar_lea.vmem %s262, %s347 [#allocation6]
          %v379 = vld [vmem:[%s378] sm:$0xff]
          %s380 = scalar_lea.vmem %s262, %s350 [#allocation6]
          %v381 = vld [vmem:[%s380] sm:$0xff]
          %s382 = scalar_lea.vmem %s262, %s353 [#allocation6]
          %v383 = vld [vmem:[%s382] sm:$0xff]
          %s384 = scalar_lea.vmem %s262, %s356 [#allocation6]
          %v385 = vld [vmem:[%s384] sm:$0xff]
          %s386 = scalar_lea.vmem %s262, %s359 [#allocation6]
          %v387 = vld [vmem:[%s386] sm:$0xff]
          %s388 = sadd.s32 %s323, 416
          %s389 = scalar_lea.vmem %s262, %s388 [#allocation6]
          %v390 = vld [vmem:[%s389] sm:$0xff]
          %s391 = sadd.s32 %s323, 448
          %s392 = scalar_lea.vmem %s262, %s391 [#allocation6]
          %v393 = vld [vmem:[%s392] sm:$0xff]
          %s394 = sadd.s32 %s323, 480
          %s395 = scalar_lea.vmem %s262, %s394 [#allocation6]
          %v396 = vld [vmem:[%s395] sm:$0xff]
          %s397 = sadd.s32 %s323, 512
          %s398 = scalar_lea.vmem %s262, %s397 [#allocation6]
          %v399 = vld [vmem:[%s398] sm:$0xff]
          %s400 = sadd.s32 %s323, 544
          %s401 = scalar_lea.vmem %s262, %s400 [#allocation6]
          %v402 = vld [vmem:[%s401] sm:$0xff]
          %s403 = sadd.s32 %s323, 576
          %s404 = scalar_lea.vmem %s262, %s403 [#allocation6]
          %v405 = vld [vmem:[%s404] sm:$0xff]
          %s406 = sadd.s32 %s323, 608
          %s407 = scalar_lea.vmem %s262, %s406 [#allocation6]
          %v408 = vld [vmem:[%s407] sm:$0xff]
          %s409 = sadd.s32 %s323, 640
          %s410 = scalar_lea.vmem %s262, %s409 [#allocation6]
          %v411 = vld [vmem:[%s410] sm:$0xff]
          %s412 = sadd.s32 %s323, 672
          %s413 = scalar_lea.vmem %s262, %s412 [#allocation6]
          %v414 = vld [vmem:[%s413] sm:$0xff]
          %s415 = sadd.s32 %s323, 704
          %s416 = scalar_lea.vmem %s262, %s415 [#allocation6]
          %v417 = vld [vmem:[%s416] sm:$0xff]
          %s418 = sadd.s32 %s323, 736
          %s419 = scalar_lea.vmem %s262, %s418 [#allocation6]
          %v420 = vld [vmem:[%s419] sm:$0xff]
          %v421 = vmul.f32 %v334, %v334
          %v422 = vmul.f32 %v337, %v337
          %v423 = vadd.f32 %v421, %v422
          %v424 = vmul.f32 %v340, %v340
          %v425 = vadd.f32 %v423, %v424
          %v426 = vmul.f32 %v343, %v343
          %v427 = vadd.f32 %v425, %v426
          %v428 = vrsqrt.pop %v427
          %v429 = vmul.f32 %v428, %v427
          %v430 = vmul.f32 %v429, %v428
          %v431 = vmul.f32 0.5, %v430
          %v432 = vsub.f32 1.5, %v431
          %v433 = vmul.f32 %v428, %v432
          %vm434 = vweird.f32 %v427
          %vm435 = vweird.f32 %v428
          %vm436 = vmor %vm434, %vm435
          %v437 = vsel %vm436, %v428, %v433
          %v438 = vmul.f32 %v334, %v437
          %v439 = vmul.f32 %v337, %v437
          %v440 = vmul.f32 %v340, %v437
          %v441 = vmul.f32 %v343, %v437
          %v442 = vmul.f32 %v439, %v439
          %v443 = vmul.f32 %v440, %v440
          %v444 = vadd.f32 %v442, %v443
          %v445 = vmul.f32 %v444, 2.0
          %v446 = vsub.f32 1.0, %v445
          %v447 = vmul.f32 %v438, %v439
          %v448 = vmul.f32 %v441, %v440
          %v449 = vsub.f32 %v447, %v448
          %v450 = vmul.f32 %v449, 2.0
          %v451 = vmul.f32 %v438, %v440
          %v452 = vmul.f32 %v441, %v439
          %v453 = vadd.f32 %v451, %v452
          %v454 = vmul.f32 %v453, 2.0
          %v455 = vadd.f32 %v447, %v448
          %v456 = vmul.f32 %v455, 2.0
          %v457 = vmul.f32 %v438, %v438
          %v458 = vadd.f32 %v457, %v443
          %v459 = vmul.f32 %v458, 2.0
          %v460 = vsub.f32 1.0, %v459
          %v461 = vmul.f32 %v439, %v440
          %v462 = vmul.f32 %v441, %v438
          %v463 = vsub.f32 %v461, %v462
          %v464 = vmul.f32 %v463, 2.0
          %v465 = vsub.f32 %v451, %v452
          %v466 = vmul.f32 %v465, 2.0
          %v467 = vadd.f32 %v461, %v462
          %v468 = vmul.f32 %v467, 2.0
          %v469 = vadd.f32 %v457, %v442
          %v470 = vmul.f32 %v469, 2.0
          %v471 = vsub.f32 1.0, %v470
          %v472 = vsub.f32 %v325, %v363
          %v473 = vsub.f32 %v328, %v365
          %v474 = vsub.f32 %v331, %v367
          %v475 = vsub.f32 %v346, %v369
          %v476 = vsub.f32 %v349, %v371
          %v477 = vsub.f32 %v352, %v373
          %v478 = vstv %s300
          %v479 = vmul.f32 %v478, %v472
          %v480 = vstv %s301
          %v481 = vmul.f32 %v480, %v475
          %v482 = vadd.f32 %v479, %v481
          %v483 = vstv %s304
          %v484 = vmul.f32 %v483, %v375
          %v485 = vadd.f32 %v482, %v484
          %v486 = vmul.f32 %v478, %v473
          %v487 = vmul.f32 %v480, %v476
          %v488 = vadd.f32 %v486, %v487
          %v489 = vmul.f32 %v483, %v377
          %v490 = vadd.f32 %v488, %v489
          %v491 = vmul.f32 %v478, %v474
          %v492 = vmul.f32 %v480, %v477
          %v493 = vadd.f32 %v491, %v492
          %v494 = vmul.f32 %v483, %v379
          %v495 = vadd.f32 %v493, %v494
          %v496 = vstv %s305
          %v497 = vsub.f32 %v495, %v496
          %v498 = vmul.f32 %v485, %v454
          %v499 = vmul.f32 %v490, %v464
          %v500 = vadd.f32 %v498, %v499
          %v501 = vmul.f32 %v497, %v471
          %v502 = vadd.f32 %v500, %v501
          %v503 = vsub.f32 0.0, %v502
          %v504 = vstv %s306
          %v505 = vmul.f32 %v503, %v504
          %v506 = vmul.f32 %v505, %v454
          %v507 = vsub.f32 %v506, %v375
          %v508 = vmul.f32 %v505, %v464
          %v509 = vsub.f32 %v508, %v377
          %v510 = vmul.f32 %v505, %v471
          %v511 = vsub.f32 %v510, %v379
          %v512 = vstv %s307
          %v513 = vadd.f32 %v511, %v512
          %v514 = vmul.f32 %v478, %v475
          %v515 = vmul.f32 %v480, %v507
          %v516 = vadd.f32 %v514, %v515
          %v517 = vmul.f32 %v483, %v381
          %v518 = vadd.f32 %v516, %v517
          %v519 = vmul.f32 %v478, %v476
          %v520 = vmul.f32 %v480, %v509
          %v521 = vadd.f32 %v519, %v520
          %v522 = vmul.f32 %v483, %v383
          %v523 = vadd.f32 %v521, %v522
          %v524 = vmul.f32 %v478, %v477
          %v525 = vmul.f32 %v480, %v513
          %v526 = vadd.f32 %v524, %v525
          %v527 = vmul.f32 %v483, %v385
          %v528 = vadd.f32 %v526, %v527
          %v529 = vmul.f32 %v446, %v358
          %v530 = vmul.f32 %v450, %v355
          %v531 = vsub.f32 %v529, %v530
          %v532 = vmul.f32 %v456, %v358
          %v533 = vmul.f32 %v460, %v355
          %v534 = vsub.f32 %v532, %v533
          %v535 = vmul.f32 %v466, %v358
          %v536 = vmul.f32 %v468, %v355
          %v537 = vsub.f32 %v535, %v536
          %v538 = vmul.f32 %v518, %v454
          %v539 = vmul.f32 %v523, %v464
          %v540 = vadd.f32 %v538, %v539
          %v541 = vmul.f32 %v528, %v471
          %v542 = vadd.f32 %v540, %v541
          %v543 = vmul.f32 %v485, %v531
          %v544 = vmul.f32 %v490, %v534
          %v545 = vadd.f32 %v543, %v544
          %v546 = vmul.f32 %v497, %v537
          %v547 = vadd.f32 %v545, %v546
          %v548 = vadd.f32 %v542, %v547
          %v549 = vsub.f32 0.0, %v548
          %v550 = vmul.f32 %v549, %v454
          %v551 = vmul.f32 %v503, %v531
          %v552 = vadd.f32 %v550, %v551
          %v553 = vmul.f32 %v552, %v504
          %v554 = vsub.f32 %v553, %v381
          %v555 = vmul.f32 %v549, %v464
          %v556 = vmul.f32 %v503, %v534
          %v557 = vadd.f32 %v555, %v556
          %v558 = vmul.f32 %v557, %v504
          %v559 = vsub.f32 %v558, %v383
          %v560 = vmul.f32 %v549, %v471
          %v561 = vmul.f32 %v503, %v537
          %v562 = vadd.f32 %v560, %v561
          %v563 = vmul.f32 %v562, %v504
          %v564 = vsub.f32 %v563, %v385
          %v565 = vmul.f32 %v478, %v507
          %v566 = vmul.f32 %v480, %v554
          %v567 = vadd.f32 %v565, %v566
          %v568 = vmul.f32 %v483, %v387
          %v569 = vadd.f32 %v567, %v568
          %v570 = vmul.f32 %v478, %v509
          %v571 = vmul.f32 %v480, %v559
          %v572 = vadd.f32 %v570, %v571
          %v573 = vmul.f32 %v483, %v390
          %v574 = vadd.f32 %v572, %v573
          %v575 = vmul.f32 %v478, %v513
          %v576 = vmul.f32 %v480, %v564
          %v577 = vadd.f32 %v575, %v576
          %v578 = vmul.f32 %v483, %v393
          %v579 = vadd.f32 %v577, %v578
          %v580 = vmul.f32 %v485, %v485
          %v581 = vmul.f32 %v490, %v490
          %v582 = vadd.f32 %v580, %v581
          %v583 = vmul.f32 %v497, %v497
          %v584 = vadd.f32 %v582, %v583
          %v585 = vrsqrt.pop %v584
          %v586 = vmul.f32 %v585, %v584
          %v587 = vmul.f32 %v586, %v585
          %v588 = vmul.f32 0.5, %v587
          %v589 = vsub.f32 1.5, %v588
          %v590 = vmul.f32 %v585, %v589
          %vm591 = vweird.f32 %v584
          %vm592 = vweird.f32 %v585
          %vm593 = vmor %vm591, %vm592
          %v594 = vsel %vm593, %v585, %v590
          %v595 = vsub.f32 0.0, %v594
          %v596 = vmul.f32 %v595, %v485
          %v597 = vmul.f32 %v595, %v490
          %v598 = vmul.f32 %v595, %v497
          %v599 = vmul.f32 %v518, %v518
          %v600 = vmul.f32 %v523, %v523
          %v601 = vadd.f32 %v599, %v600
          %v602 = vmul.f32 %v528, %v528
          %v603 = vadd.f32 %v601, %v602
          %v604 = vrsqrt.pop %v603
          %v605 = vmul.f32 %v604, %v603
          %v606 = vmul.f32 %v605, %v604
          %v607 = vmul.f32 0.5, %v606
          %v608 = vsub.f32 1.5, %v607
          %v609 = vmul.f32 %v604, %v608
          %vm610 = vweird.f32 %v603
          %vm611 = vweird.f32 %v604
          %vm612 = vmor %vm610, %vm611
          %v613 = vsel %vm612, %v604, %v609
          %v614 = vsub.f32 0.0, %v613
          %v615 = vmul.f32 %v614, %v518
          %v616 = vmul.f32 %v614, %v523
          %v617 = vmul.f32 %v614, %v528
          %v618 = vmul.f32 %v569, %v569
          %v619 = vmul.f32 %v574, %v574
          %v620 = vadd.f32 %v618, %v619
          %v621 = vmul.f32 %v579, %v579
          %v622 = vadd.f32 %v620, %v621
          %v623 = vrsqrt.pop %v622
          %v624 = vmul.f32 %v623, %v622
          %v625 = vmul.f32 %v624, %v623
          %v626 = vmul.f32 0.5, %v625
          %v627 = vsub.f32 1.5, %v626
          %v628 = vmul.f32 %v623, %v627
          %vm629 = vweird.f32 %v622
          %vm630 = vweird.f32 %v623
          %vm631 = vmor %vm629, %vm630
          %v632 = vsel %vm631, %v623, %v628
          %v633 = vsub.f32 0.0, %v632
          %v634 = vmul.f32 %v633, %v569
          %v635 = vmul.f32 %v633, %v574
          %v636 = vmul.f32 %v633, %v579
          %v637 = vmul.f32 %v597, %v402
          %v638 = vmul.f32 %v598, %v399
          %v639 = vsub.f32 %v637, %v638
          %v640 = vmul.f32 %v598, %v396
          %v641 = vmul.f32 %v596, %v402
          %v642 = vsub.f32 %v640, %v641
          %v643 = vmul.f32 %v596, %v399
          %v644 = vmul.f32 %v597, %v396
          %v645 = vsub.f32 %v643, %v644
          %v646 = vmul.f32 %v616, %v402
          %v647 = vmul.f32 %v617, %v399
          %v648 = vsub.f32 %v646, %v647
          %v649 = vmul.f32 %v617, %v396
          %v650 = vmul.f32 %v615, %v402
          %v651 = vsub.f32 %v649, %v650
          %v652 = vmul.f32 %v615, %v399
          %v653 = vmul.f32 %v616, %v396
          %v654 = vsub.f32 %v652, %v653
          %v655 = vmul.f32 %v597, %v411
          %v656 = vmul.f32 %v598, %v408
          %v657 = vsub.f32 %v655, %v656
          %v658 = vmul.f32 %v598, %v405
          %v659 = vmul.f32 %v596, %v411
          %v660 = vsub.f32 %v658, %v659
          %v661 = vmul.f32 %v596, %v408
          %v662 = vmul.f32 %v597, %v405
          %v663 = vsub.f32 %v661, %v662
          %v664 = vadd.f32 %v648, %v657
          %v665 = vadd.f32 %v651, %v660
          %v666 = vadd.f32 %v654, %v663
          %v667 = vmul.f32 %v635, %v402
          %v668 = vmul.f32 %v636, %v399
          %v669 = vsub.f32 %v667, %v668
          %v670 = vmul.f32 %v636, %v396
          %v671 = vmul.f32 %v634, %v402
          %v672 = vsub.f32 %v670, %v671
          %v673 = vmul.f32 %v634, %v399
          %v674 = vmul.f32 %v635, %v396
          %v675 = vsub.f32 %v673, %v674
          %v676 = vmul.f32 %v616, %v411
          %v677 = vmul.f32 %v617, %v408
          %v678 = vsub.f32 %v676, %v677
          %v679 = vmul.f32 %v617, %v405
          %v680 = vmul.f32 %v615, %v411
          %v681 = vsub.f32 %v679, %v680
          %v682 = vmul.f32 %v615, %v408
          %v683 = vmul.f32 %v616, %v405
          %v684 = vsub.f32 %v682, %v683
          %v685 = vmul.f32 %v678, 2.0
          %v686 = vmul.f32 %v681, 2.0
          %v687 = vmul.f32 %v684, 2.0
          %v688 = vadd.f32 %v669, %v685
          %v689 = vadd.f32 %v672, %v686
          %v690 = vadd.f32 %v675, %v687
          %v691 = vmul.f32 %v597, %v420
          %v692 = vmul.f32 %v598, %v417
          %v693 = vsub.f32 %v691, %v692
          %v694 = vmul.f32 %v598, %v414
          %v695 = vmul.f32 %v596, %v420
          %v696 = vsub.f32 %v694, %v695
          %v697 = vmul.f32 %v596, %v417
          %v698 = vmul.f32 %v597, %v414
          %v699 = vsub.f32 %v697, %v698
          %v700 = vadd.f32 %v688, %v693
          %v701 = vadd.f32 %v689, %v696
          %v702 = vadd.f32 %v690, %v699
          %v703 = vmul.f32 %v664, %v664
          %v704 = vmul.f32 %v665, %v665
          %v705 = vadd.f32 %v703, %v704
          %v706 = vmul.f32 %v666, %v666
          %v707 = vadd.f32 %v705, %v706
          %v708 = vrsqrt.pop %v707
          %v709 = vmul.f32 %v708, %v707
          %v710 = vmul.f32 %v709, %v708
          %v711 = vmul.f32 0.5, %v710
          %v712 = vsub.f32 1.5, %v711
          %v713 = vmul.f32 %v708, %v712
          %vm714 = vweird.f32 %v707
          %vm715 = vweird.f32 %v708
          %vm716 = vmor %vm714, %vm715
          %v717 = vsel %vm716, %v708, %v713
          %v718 = vmul.f32 %v700, %v700
          %v719 = vmul.f32 %v701, %v701
          %v720 = vadd.f32 %v718, %v719
          %v721 = vmul.f32 %v702, %v702
          %v722 = vadd.f32 %v720, %v721
          %v723 = vrsqrt.pop %v722
          %v724 = vmul.f32 %v723, %v722
          %v725 = vmul.f32 %v724, %v723
          %v726 = vmul.f32 0.5, %v725
          %v727 = vsub.f32 1.5, %v726
          %v728 = vmul.f32 %v723, %v727
          %vm729 = vweird.f32 %v722
          %vm730 = vweird.f32 %v723
          %vm731 = vmor %vm729, %vm730
          %v732 = vsel %vm731, %v723, %v728
          %v733 = vmul.f32 %v639, %v639
          %v734 = vmul.f32 %v642, %v642
          %v735 = vadd.f32 %v733, %v734
          %v736 = vmul.f32 %v645, %v645
          %v737 = vadd.f32 %v735, %v736
          %v738 = vrsqrt.pop %v737
          %v739 = vmul.f32 %v738, %v737
          %v740 = vmul.f32 %v739, %v738
          %v741 = vmul.f32 0.5, %v740
          %v742 = vsub.f32 1.5, %v741
          %v743 = vmul.f32 %v738, %v742
          %vm744 = vweird.f32 %v737
          %vm745 = vweird.f32 %v738
          %vm746 = vmor %vm744, %vm745
          %v747 = vsel %vm746, %v738, %v743
          %v748 = vmul.f32 %v747, %v639
          %v749 = vmul.f32 %v747, %v642
          %v750 = vmul.f32 %v747, %v645
          %v751 = vmul.f32 %v717, %v748
          %v752 = vmul.f32 %v717, %v749
          %v753 = vmul.f32 %v717, %v750
          %v754 = vmul.f32 %v732, %v748
          %v755 = vmul.f32 %v732, %v749
          %v756 = vmul.f32 %v732, %v750
          %v757 = vmul.f32 %v749, %v598
          %v758 = vmul.f32 %v750, %v597
          %v759 = vsub.f32 %v757, %v758
          %v760 = vmul.f32 %v750, %v596
          %v761 = vmul.f32 %v748, %v598
          %v762 = vsub.f32 %v760, %v761
          %v763 = vmul.f32 %v748, %v597
          %v764 = vmul.f32 %v749, %v596
          %v765 = vsub.f32 %v763, %v764
          %v766 = vmul.f32 %v748, %v748
          %v767 = vmul.f32 %v749, %v749
          %v768 = vadd.f32 %v766, %v767
          %v769 = vmul.f32 %v750, %v750
          %v770 = vadd.f32 %v768, %v769
          %v771 = vrsqrt.pop %v770
          %v772 = vmul.f32 %v771, %v770
          %v773 = vmul.f32 %v772, %v771
          %v774 = vmul.f32 0.5, %v773
          %v775 = vsub.f32 1.5, %v774
          %v776 = vmul.f32 %v771, %v775
          %vm777 = vweird.f32 %v770
          %vm778 = vweird.f32 %v771
          %vm779 = vmor %vm777, %vm778
          %v780 = vsel %vm779, %v771, %v776
          %v781 = vmul.f32 %v780, %v748
          %v782 = vmul.f32 %v780, %v749
          %v783 = vmul.f32 %v780, %v750
          %v784 = vmul.f32 %v781, %v615
          %v785 = vmul.f32 %v782, %v616
          %v786 = vadd.f32 %v784, %v785
          %v787 = vmul.f32 %v783, %v617
          %v788 = vadd.f32 %v786, %v787
          %v789 = vsub.f32 0.0, %v788
          %v790 = vmul.f32 %v759, %v615
          %v791 = vmul.f32 %v762, %v616
          %v792 = vadd.f32 %v790, %v791
          %v793 = vmul.f32 %v765, %v617
          %v794 = vadd.f32 %v792, %v793
          %v795 = vmul.f32 %v759, %v751
          %v796 = vmul.f32 %v762, %v752
          %v797 = vadd.f32 %v795, %v796
          %v798 = vmul.f32 %v765, %v753
          %v799 = vadd.f32 %v797, %v798
          %v800 = vsub.f32 0.0, %v799
          %v801 = vmul.f32 %v781, %v634
          %v802 = vmul.f32 %v782, %v635
          %v803 = vadd.f32 %v801, %v802
          %v804 = vmul.f32 %v783, %v636
          %v805 = vadd.f32 %v803, %v804
          %v806 = vmul.f32 %v794, %v800
          %v807 = vsub.f32 %v805, %v806
          %v808 = vsub.f32 0.0, %v807
          %v809 = vmul.f32 %v759, %v634
          %v810 = vmul.f32 %v762, %v635
          %v811 = vadd.f32 %v809, %v810
          %v812 = vmul.f32 %v765, %v636
          %v813 = vadd.f32 %v811, %v812
          %v814 = vmul.f32 %v789, %v800
          %v815 = vsub.f32 %v813, %v814
          %v816 = vmul.f32 %v759, %v754
          %v817 = vmul.f32 %v762, %v755
          %v818 = vadd.f32 %v816, %v817
          %v819 = vmul.f32 %v765, %v756
          %v820 = vadd.f32 %v818, %v819
          %v821 = vmul.f32 %v789, %v794
          %v822 = vsub.f32 %v820, %v821
          %v823 = vsub.f32 0.0, %v822
          %v824 = vmul.f32 %v781, %v454
          %v825 = vmul.f32 %v782, %v464
          %v826 = vadd.f32 %v824, %v825
          %v827 = vmul.f32 %v783, %v471
          %v828 = vadd.f32 %v826, %v827
          %v829 = vmul.f32 %v596, %v450
          %v830 = vmul.f32 %v597, %v460
          %v831 = vadd.f32 %v829, %v830
          %v832 = vmul.f32 %v598, %v468
          %v833 = vadd.f32 %v831, %v832
          %v834 = vsub.f32 %v828, %v833
          %v835 = vmul.f32 %v596, %v446
          %v836 = vmul.f32 %v597, %v456
          %v837 = vadd.f32 %v835, %v836
          %v838 = vmul.f32 %v598, %v466
          %v839 = vadd.f32 %v837, %v838
          %v840 = vmul.f32 %v759, %v454
          %v841 = vmul.f32 %v762, %v464
          %v842 = vadd.f32 %v840, %v841
          %v843 = vmul.f32 %v765, %v471
          %v844 = vadd.f32 %v842, %v843
          %v845 = vsub.f32 %v839, %v844
          %v846 = vmul.f32 %v759, %v450
          %v847 = vmul.f32 %v762, %v460
          %v848 = vadd.f32 %v846, %v847
          %v849 = vmul.f32 %v765, %v468
          %v850 = vadd.f32 %v848, %v849
          %v851 = vmul.f32 %v781, %v446
          %v852 = vmul.f32 %v782, %v456
          %v853 = vadd.f32 %v851, %v852
          %v854 = vmul.f32 %v783, %v466
          %v855 = vadd.f32 %v853, %v854
          %v856 = vsub.f32 %v850, %v855
          %v857 = vmul.f32 %v789, %v759
          %v858 = vmul.f32 %v789, %v762
          %v859 = vmul.f32 %v789, %v765
          %v860 = vmul.f32 %v794, %v781
          %v861 = vmul.f32 %v794, %v782
          %v862 = vmul.f32 %v794, %v783
          %v863 = vadd.f32 %v857, %v860
          %v864 = vadd.f32 %v858, %v861
          %v865 = vadd.f32 %v859, %v862
          %v866 = vmul.f32 %v800, %v596
          %v867 = vmul.f32 %v800, %v597
          %v868 = vmul.f32 %v800, %v598
          %v869 = vadd.f32 %v863, %v866
          %v870 = vadd.f32 %v864, %v867
          %v871 = vadd.f32 %v865, %v868
          %v872 = vmul.f32 %v446, %v869
          %v873 = vmul.f32 %v456, %v870
          %v874 = vadd.f32 %v872, %v873
          %v875 = vmul.f32 %v466, %v871
          %v876 = vadd.f32 %v874, %v875
          %v877 = vmul.f32 %v450, %v869
          %v878 = vmul.f32 %v460, %v870
          %v879 = vadd.f32 %v877, %v878
          %v880 = vmul.f32 %v468, %v871
          %v881 = vadd.f32 %v879, %v880
          %v882 = vmul.f32 %v454, %v869
          %v883 = vmul.f32 %v464, %v870
          %v884 = vadd.f32 %v882, %v883
          %v885 = vmul.f32 %v471, %v871
          %v886 = vadd.f32 %v884, %v885
          %v887 = vmul.f32 %v808, %v759
          %v888 = vmul.f32 %v808, %v762
          %v889 = vmul.f32 %v808, %v765
          %v890 = vmul.f32 %v815, %v781
          %v891 = vmul.f32 %v815, %v782
          %v892 = vmul.f32 %v815, %v783
          %v893 = vadd.f32 %v887, %v890
          %v894 = vadd.f32 %v888, %v891
          %v895 = vadd.f32 %v889, %v892
          %v896 = vmul.f32 %v823, %v596
          %v897 = vmul.f32 %v823, %v597
          %v898 = vmul.f32 %v823, %v598
          %v899 = vadd.f32 %v893, %v896
          %v900 = vadd.f32 %v894, %v897
          %v901 = vadd.f32 %v895, %v898
          %v902 = vmul.f32 %v446, %v899
          %v903 = vmul.f32 %v456, %v900
          %v904 = vadd.f32 %v902, %v903
          %v905 = vmul.f32 %v466, %v901
          %v906 = vadd.f32 %v904, %v905
          %v907 = vmul.f32 %v450, %v899
          %v908 = vmul.f32 %v460, %v900
          %v909 = vadd.f32 %v907, %v908
          %v910 = vmul.f32 %v468, %v901
          %v911 = vadd.f32 %v909, %v910
          %v912 = vmul.f32 %v454, %v899
          %v913 = vmul.f32 %v464, %v900
          %v914 = vadd.f32 %v912, %v913
          %v915 = vmul.f32 %v471, %v901
          %v916 = vadd.f32 %v914, %v915
          %v917 = vsub.f32 %v355, %v876
          %v918 = vsub.f32 %v358, %v881
          %v919 = vsub.f32 %v361, %v886
          %v920 = vstv %s308
          %v921 = vmul.f32 %v920, %v355
          %v922 = vstv %s309
          %v923 = vmul.f32 %v922, %v358
          %v924 = vadd.f32 %v921, %v923
          %v925 = vstv %s310
          %v926 = vmul.f32 %v925, %v361
          %v927 = vadd.f32 %v924, %v926
          %v928 = vstv %s311
          %v929 = vmul.f32 %v928, %v355
          %v930 = vstv %s312
          %v931 = vmul.f32 %v930, %v358
          %v932 = vadd.f32 %v929, %v931
          %v933 = vstv %s313
          %v934 = vmul.f32 %v933, %v361
          %v935 = vadd.f32 %v932, %v934
          %v936 = vstv %s314
          %v937 = vmul.f32 %v936, %v355
          %v938 = vstv %s315
          %v939 = vmul.f32 %v938, %v358
          %v940 = vadd.f32 %v937, %v939
          %v941 = vstv %s316
          %v942 = vmul.f32 %v941, %v361
          %v943 = vadd.f32 %v940, %v942
          %v944 = vmul.f32 %v358, %v943
          %v945 = vmul.f32 %v361, %v935
          %v946 = vsub.f32 %v944, %v945
          %v947 = vmul.f32 %v361, %v927
          %v948 = vmul.f32 %v355, %v943
          %v949 = vsub.f32 %v947, %v948
          %v950 = vmul.f32 %v355, %v935
          %v951 = vmul.f32 %v358, %v927
          %v952 = vsub.f32 %v950, %v951
          %v953 = vsub.f32 %v876, %v906
          %v954 = vsub.f32 %v881, %v911
          %v955 = vsub.f32 %v886, %v916
          %v956 = vmul.f32 %v358, %v955
          %v957 = vmul.f32 %v361, %v954
          %v958 = vsub.f32 %v956, %v957
          %v959 = vmul.f32 %v361, %v953
          %v960 = vmul.f32 %v355, %v955
          %v961 = vsub.f32 %v959, %v960
          %v962 = vmul.f32 %v355, %v954
          %v963 = vmul.f32 %v358, %v953
          %v964 = vsub.f32 %v962, %v963
          %v965 = vmul.f32 %v920, %v958
          %v966 = vmul.f32 %v922, %v961
          %v967 = vadd.f32 %v965, %v966
          %v968 = vmul.f32 %v925, %v964
          %v969 = vadd.f32 %v967, %v968
          %v970 = vmul.f32 %v928, %v958
          %v971 = vmul.f32 %v930, %v961
          %v972 = vadd.f32 %v970, %v971
          %v973 = vmul.f32 %v933, %v964
          %v974 = vadd.f32 %v972, %v973
          %v975 = vmul.f32 %v936, %v958
          %v976 = vmul.f32 %v938, %v961
          %v977 = vadd.f32 %v975, %v976
          %v978 = vmul.f32 %v941, %v964
          %v979 = vadd.f32 %v977, %v978
          %v980 = vmax.f32 %v503, 0.0
          %s981 = scalar_lea.vmem %s296, %s323 [#allocation9]
          %982 = vst [vmem:[%s981] sm:$0xff] %v980
          %v983 = vstv %s302
          %v984 = vmul.f32 %v983, %v834
          %v985 = vstv %s303
          %v986 = vmul.f32 %v985, %v917
          %v987 = vadd.f32 %v984, %v986
          %v988 = vadd.f32 %v987, %v946
          %v989 = vsub.f32 %v988, %v969
          %s990 = scalar_lea.vmem %s296, %s326 [#allocation9]
          %991 = vst [vmem:[%s990] sm:$0xff] %v989
          %v992 = vmul.f32 %v983, %v845
          %v993 = vmul.f32 %v985, %v918
          %v994 = vadd.f32 %v992, %v993
          %v995 = vadd.f32 %v994, %v949
          %v996 = vsub.f32 %v995, %v974
          %s997 = scalar_lea.vmem %s296, %s329 [#allocation9]
          %998 = vst [vmem:[%s997] sm:$0xff] %v996
          %v999 = vmul.f32 %v983, %v856
          %v1000 = vmul.f32 %v985, %v919
          %v1001 = vadd.f32 %v999, %v1000
          %v1002 = vadd.f32 %v1001, %v952
          %v1003 = vsub.f32 %v1002, %v979
          %s1004 = scalar_lea.vmem %s296, %s332 [#allocation9]
          %1005 = vst [vmem:[%s1004] sm:$0xff] %v1003
        $region49: #{tpu_custom_call.1} parent=31 // loop_footer
          %s322 = sadd.s32 1, %s318
        $region50: #{tpu_custom_call.1} parent=31 // loop_footer_branch
          %317 = sbr.rel target = $region46
        $region51: #{tpu_custom_call.1} parent=31 // loop_exit
          _
        %s1006 = sand.u32 %s105, 1
        %s1007 = scalar_lea.sflag [#allocation4], %s1006
        %s1008 = sand.u32 %s105, 1
        %s1009 = smul.addr %s1008, 128
        %s1010 = scalar_lea.vmem [#allocation9], %s1009
        // Predicated region
        $region52: #{tpu_custom_call.1} parent=31 // pred_check
          %p1011 = pneg %p115
        $region53: #{tpu_custom_call.1} parent=31 // pred_check_branch
          %1013 = sbr.rel (%p1011) target = $region55
        $region54: #{tpu_custom_call.1} parent=31 // pred_region
          #allocation15 [shape = 'u32[6]{0}', space=smem, size = 0x18, scoped, tag = 'DMA stride descriptor']
          %s1014 = smul.u32 4, %s24
          %1016 = vsyncadd %s1007, 0
          %s1017 = smul.addr %s1014, 8
          %s1018 = scalar_lea.hbm %s3, %s1017
          %s1020 = sshll.u32 1, 14
          %s1021 = sxor.u32 4294967295, %s1020
          %s1024 = sshll.u32 7, 18
          %s1025 = sxor.u32 4294967295, %s1024
          %s1026 = sand.u32 0, %s1025
          %s1028 = sor.u32 %s1026, 0
          %s1029 = sshll.u32 %s1010, 4
          %s1030 = int_to_ptr.vmem [resolvable:$true] %s1029
          %s1031 = sshll.u32 %s1018, 4
          %s1032 = int_to_ptr.hbm [resolvable:$true] %s1031
          %1038 = sst [smem:[#allocation15]] 512
          %s1039 = scalar_lea.smem [#allocation15], 1
          %1040 = sst [smem:[%s1039]] 1024
          %s1041 = scalar_lea.smem [#allocation15], 2
          %1042 = sst [smem:[%s1041]] 4
          %s1043 = scalar_lea.smem [#allocation15], 3
          %1044 = sst [smem:[%s1043]] 128
          %s1045 = scalar_lea.smem [#allocation15], 4
          %1046 = sst [smem:[%s1045]] 128
          %s1047 = scalar_lea.smem [#allocation15], 5
          %1048 = sst [smem:[%s1047]] 8
          %1050 = dma.general %s1030, 2048, %s1032, %s1007, [#allocation14], [#allocation15], %s1028, 0
        $region55: #{tpu_custom_call.1} parent=31 // pred_fallthru
          _
      $region32: #{tpu_custom_call.1} parent=5 // pred_fallthru
        _
      %p1051 = scmp.le.s32.totalorder 2, %s19
      // Predicated region
      $region56: #{tpu_custom_call.1} parent=5 // pred_check
        %p1052 = pneg %p1051
      $region57: #{tpu_custom_call.1} parent=5 // pred_check_branch
        %1054 = sbr.rel (%p1052) target = $region59
      $region58: #{tpu_custom_call.1} parent=5 // pred_region
        %s1055 = ssub.s32 %s19, 2
        // Predicated region
        $region60: #{tpu_custom_call.1} parent=58 // pred_check
          %p1056 = pneg %p121
        $region61: #{tpu_custom_call.1} parent=58 // pred_check_branch
          %1058 = sbr.rel (%p1056) target = $region63
        $region62: #{tpu_custom_call.1} parent=58 // pred_region
          %s1059 = sand.u32 %s106, 1
          %s1060 = scalar_lea.sflag [#allocation4], %s1059
          %s1061 = sand.u32 %s106, 1
          %s1062 = smul.addr %s1061, 128
          %s1063 = scalar_lea.vmem [#allocation9], %s1062
          %1065 = dma.done %s1060, 2048
        $region63: #{tpu_custom_call.1} parent=58 // pred_fallthru
          _
      $region59: #{tpu_custom_call.1} parent=5 // pred_fallthru
        _
    $region6: #{tpu_custom_call.1} parent=1 // loop_footer
      %s23 = sadd.s32 1, %s19
    $region7: #{tpu_custom_call.1} parent=1 // loop_footer_branch
      %18 = sbr.rel target = $region3
    $region8: #{tpu_custom_call.1} parent=1 // loop_exit
      _
    %1066 = vsyncpa [#allocation3], 1
    %s1067 = scalar_lea.sflag [#allocation3], 1
    %1068 = vsyncpa %s1067, 1
    %1069 = vsyncpa [#allocation7], 1
    %s1070 = scalar_lea.sflag [#allocation7], 1
    %1071 = vsyncpa %s1070, 1
    %1072 = vsyncpa [#allocation4], 1
    %s1073 = scalar_lea.sflag [#allocation4], 1
    %1074 = vsyncpa %s1073, 1
    %1075 = vsyncpa [#allocation5], 1
    %s1076 = scalar_lea.sflag [#allocation5], 1
    %1077 = vsyncpa %s1076, 1

</llo_original>
